<compile_context>
chip_gen: v7x
topology: tpu7x:2x2x1
jax: 0.10.0
libtpu: 0.0.40
codegen_flags: <defaults>
</compile_context>

<pallas_src>
from functools import partial

import jax
import jax.numpy as jnp
from jax.experimental import pallas as pl
from jax.experimental.pallas import tpu as pltpu


# ----------------------------------------------------------------------------
# Fused kernel: graph propagation (all T timesteps, lane-dense) + GLU.
# One grid step handles `Bb` batch elements:
#   Bb == B  -> single grid step, batch folded into sublanes (v5e / v6e).
#   Bb == 1  -> grid=(B,) "parallel", one batch element per TensorCore (v7x).
# ----------------------------------------------------------------------------
def _dsgnn_kernel(adj_ref, x_ref, w_ref, b_ref, o_ref, blk_ref):
    """
    adj_ref : (Bb, M, N)   f32  effective per-batch adjacency (built in XLA).
    x_ref   : (Bb, N, T*C) f32  inputs, time folded into the lane dimension.
    w_ref   : (C, 2*C)     f32  compact fused GLU weight  [W1 | W2].
    b_ref   : (1, 2*C)     f32  compact fused GLU bias    [b1 | b2].
    o_ref   : (Bb, M, T*C)      output slab (lane-dense, one unmasked store).
    blk_ref : (Bb*M, Bb*N) f32  VMEM scratch for the block-diagonal adjacency.
    """
    Bb, M, N = adj_ref.shape
    TC = x_ref.shape[-1]
    C = w_ref.shape[0]
    T = TC // C

    # ---- graph propagation ---------------------------------------------------
    if Bb == 1:
        # y[m, t*C + c] = sum_n adj[m, n] * x[t, n, c]
        y = jnp.dot(adj_ref[0], x_ref[0], preferred_element_type=jnp.float32)
    else:
        # Fold the batch into sublanes: build a tiny block-diagonal adjacency
        # in scratch (Bb static -> unrolled stores) and do ONE matmul
        # (Bb*M, Bb*N) @ (Bb*N, T*C).
        blk_ref[...] = jnp.zeros_like(blk_ref)
        for b in range(Bb):
            blk_ref[b * M:(b + 1) * M, b * N:(b + 1) * N] = adj_ref[b]
        x_flat = x_ref[...].reshape(Bb * N, TC)            # leading-dim merge (free)
        y = jnp.dot(blk_ref[...], x_flat, preferred_element_type=jnp.float32)
    # y: (Bb*M, T*C)

    # ---- GLU with the compact (C, 2C) fused weight, unrolled over T ----------
    w = w_ref[...]
    bias = b_ref[...]
    gs = []
    for t in range(T):                                      # T static -> unrolled
        h = jnp.dot(y[:, t * C:(t + 1) * C], w,
                    preferred_element_type=jnp.float32) + bias      # (Bb*M, 2C)
        gs.append(h[:, :C] * jax.nn.sigmoid(h[:, C:]))               # (Bb*M, C)
    g = jnp.concatenate(gs, axis=-1)                        # (Bb*M, T*C)

    o_ref[...] = g.reshape(o_ref.shape).astype(o_ref.dtype)


def _dsgnn_pallas(adj_eff, x, w12, b12, batch_block):
    B, T, N, C = x.shape
    M = adj_eff.shape[1]
    TC = T * C
    Bb = batch_block
    assert B % Bb == 0
    G = B // Bb

    # Layout plumbing in XLA: (B, T, N, C) -> (B, N, T*C) lane-dense slabs.
    x_r = jnp.transpose(x, (0, 2, 1, 3)).reshape(B, N, TC)

    out = pl.pallas_call(
        _dsgnn_kernel,
        out_shape=jax.ShapeDtypeStruct((B, M, TC), x.dtype),
        grid=(G,),
        in_specs=[
            pl.BlockSpec((Bb, M, N), lambda g: (g, 0, 0)),
            pl.BlockSpec((Bb, N, TC), lambda g: (g, 0, 0)),
            pl.BlockSpec((C, 2 * C), lambda g: (0, 0)),
            pl.BlockSpec((1, 2 * C), lambda g: (0, 0)),
        ],
        out_specs=pl.BlockSpec((Bb, M, TC), lambda g: (g, 0, 0)),
        scratch_shapes=[pltpu.VMEM((Bb * M, Bb * N), jnp.float32)],
        compiler_params=pltpu.CompilerParams(
            dimension_semantics=("parallel",)),   # only matters when G == B (v7x)
    )(adj_eff, x_r, w12, b12)

    # (B, M, T*C) -> (B, T, M, C)
    return jnp.transpose(out.reshape(B, M, T, C), (0, 2, 1, 3))


@partial(jax.jit, static_argnames=("use_last_only", "num_of_times", "batch_block"))
def _dsgnn_apply(U, V, w12, b12, x, ti, di, *, use_last_only, num_of_times,
                 batch_block):
    B = x.shape[0]
    if use_last_only:
        # Static branch (ep < S2D): only A[-1] is needed; no 3-way average.
        a_last = jax.nn.softmax(
            jnp.maximum(jnp.dot(U[-1], V[-1]), 0.0), axis=-1)            # (M, N)
        adj_eff = jnp.broadcast_to(a_last, (B,) + a_last.shape)          # (B, M, N)
    else:
        # Dynamic branch: all K adjacencies are parameter-only (~20 KiB), built
        # once in XLA, gathered and pre-averaged; the kernel sees 2 KiB.
        uv = jnp.einsum('kml,kln->kmn', U, V)
        A = jax.nn.softmax(jnp.maximum(uv, 0.0), axis=-1)                # (K, M, N)
        adj_eff = (A[ti] + A[num_of_times + di] + A[-1][None]) / 3.0     # (B, M, N)
    return _dsgnn_pallas(adj_eff, x, w12, b12, batch_block)


def _default_batch_block(batch):
    """v7x has 2 TensorCores/chip: keep grid=(B,) 'parallel' so the batch maps
    onto both cores.  v5e / v6e are single-core: fold the whole batch into one
    grid step (block-diagonal adjacency) and skip per-step pipeline overhead."""
    try:
        kind = jax.devices()[0].device_kind.lower()
    except Exception:
        kind = ""
    if ("v7" in kind or "7x" in kind) and batch > 1:
        return 1
    return batch


# ----------------------------------------------------------------------------
# Module wrapper (parameter init, cached fused GLU weights, branch handling)
# ----------------------------------------------------------------------------
class DynamicSpatialGNN:
    def __init__(self, in_num_of_nodes, out_num_of_nodes, num_of_latent,
                 num_of_times, num_of_days, d_model, key):
        K = num_of_times + num_of_days + 1
        self.num_of_times = num_of_times
        self.K = K
        k1, k2, k3, k4, k5, k6 = jax.random.split(key, 6)
        self.U = 0.1 * jax.random.normal(k1, (K, out_num_of_nodes, num_of_latent), jnp.float32)
        self.V = 0.1 * jax.random.normal(k2, (K, num_of_latent, in_num_of_nodes), jnp.float32)
        scale = 1.0 / (d_model ** 0.5)
        self.W1 = scale * jax.random.normal(k3, (d_model, d_model), jnp.float32)
        self.b1 = 0.01 * jax.random.normal(k4, (1, d_model), jnp.float32)
        self.W2 = scale * jax.random.normal(k5, (d_model, d_model), jnp.float32)
        self.b2 = 0.01 * jax.random.normal(k6, (1, d_model), jnp.float32)
        # Compact fused GLU weight/bias, built once (not per forward call).
        self.W12 = jnp.concatenate([self.W1, self.W2], axis=1)   # (C, 2C)
        self.b12 = jnp.concatenate([self.b1, self.b2], axis=1)   # (1, 2C)

    def __call__(self, x, ti, di, ep, S2D):
        # x: (B, T, N, C); ti, di: (B,) int32; ep/S2D: Python ints (trace-time
        # branch, matching the original module's eager `if ep < S2D`).
        B = x.shape[0]
        # TODO(synk): training-mode dropout (p=0.9) on the adjacency not implemented.
        return _dsgnn_apply(
            self.U, self.V, self.W12, self.b12,
            x, ti.astype(jnp.int32), di.astype(jnp.int32),
            use_last_only=bool(ep < S2D),
            num_of_times=self.num_of_times,
            batch_block=_default_batch_block(B),
        )


# ----------------------------------------------------------------------------
# Pure-JAX reference (for correctness check only)
# ----------------------------------------------------------------------------
def reference_forward(model, x, ti, di, ep, S2D):
    uv = jnp.einsum('kml,kln->kmn', model.U, model.V)
    A = jax.nn.softmax(jnp.maximum(uv, 0.0), axis=-1)
    if ep < S2D:
        y = jnp.einsum('mn,btnc->btmc', A[-1], x)
    else:
        adjs = (A[ti] + A[model.num_of_times + di] + A[-1][None]) / 3.0
        y = jnp.einsum('bmn,btnc->btmc', adjs, x)
    h1 = jnp.einsum('btmc,cd->btmd', y, model.W1) + model.b1
    h2 = jnp.einsum('btmc,cd->btmd', y, model.W2) + model.b2
    return h1 * jax.nn.sigmoid(h2)


if __name__ == "__main__":
    key = jax.random.PRNGKey(0)
    k_param, k_x = jax.random.split(key)

    # Small shapes consistent with the module.
    B, T = 2, 8
    in_nodes, out_nodes, latent = 16, 16, 4
    num_times, num_days = 12, 7
    d_model = 32

    model = DynamicSpatialGNN(in_nodes, out_nodes, latent,
                              num_times, num_days, d_model, k_param)

    x = jax.random.normal(k_x, (B, T, in_nodes, d_model), jnp.float32)
    ti = jnp.array([3, 7], dtype=jnp.int32)
    di = jnp.array([2, 5], dtype=jnp.int32)

    # Static branch (ep < S2D)
    out_static = jax.block_until_ready(model(x, ti, di, ep=0, S2D=5))
    assert out_static.shape == (B, T, out_nodes, d_model)
    ref_static = reference_forward(model, x, ti, di, ep=0, S2D=5)
    assert jnp.allclose(out_static, ref_static, rtol=2e-2, atol=2e-2), \
        float(jnp.max(jnp.abs(out_static - ref_static)))

    # Dynamic branch (ep >= S2D)
    out_dyn = jax.block_until_ready(model(x, ti, di, ep=10, S2D=5))
    assert out_dyn.shape == (B, T, out_nodes, d_model)
    ref_dyn = reference_forward(model, x, ti, di, ep=10, S2D=5)
    assert jnp.allclose(out_dyn, ref_dyn, rtol=2e-2, atol=2e-2), \
        float(jnp.max(jnp.abs(out_dyn - ref_dyn)))

    print("KERNEL_OK")
</pallas_src>

<mosaic_0001>
module attributes {stable_mosaic.version = 11 : i64} {
  func.func @_dsgnn_kernel(%arg0: i32, %arg1: memref<2x16x16xf32, #tpu.memory_space<vmem>>, %arg2: memref<2x16x256xf32, #tpu.memory_space<vmem>>, %arg3: memref<32x64xf32, #tpu.memory_space<vmem>>, %arg4: memref<1x64xf32, #tpu.memory_space<vmem>>, %arg5: memref<2x16x256xf32, #tpu.memory_space<vmem>>, %arg6: memref<32x32xf32, #tpu.memory_space<vmem>>) attributes {dimension_semantics = [#tpu.dimension_semantics<parallel>], iteration_bounds = array<i64: 1>, scalar_prefetch = 0 : i64, scratch_operands = 1 : i64, tpu.core_type = #tpu.core_type<tc>, window_params = [{transform_indices = @transform_0, window_bounds = array<i64: 2, 16, 16>}, {transform_indices = @transform_1, window_bounds = array<i64: 2, 16, 256>}, {pipeline_mode = #tpu.pipeline_mode<synchronous>, transform_indices = @transform_2, window_bounds = array<i64: 32, 64>}, {pipeline_mode = #tpu.pipeline_mode<synchronous>, transform_indices = @transform_3, window_bounds = array<i64: 1, 64>}, {transform_indices = @transform_4, window_bounds = array<i64: 2, 16, 256>}]} {
    %cst = arith.constant 0.000000e+00 : f32
    %0 = vector.broadcast %cst : f32 to vector<32x32xf32>
    %c0 = arith.constant 0 : index
    %c0_0 = arith.constant 0 : index
    %1 = vector.load %arg6[%c0, %c0_0] : memref<32x32xf32, #tpu.memory_space<vmem>>, vector<32x32xf32>
    tpu.vector_store %arg6[%c0, %c0_0], %0 {strides = array<i32>} : memref<32x32xf32, #tpu.memory_space<vmem>>, vector<32x32xf32>,
    %c0_1 = arith.constant 0 : index
    %c0_2 = arith.constant 0 : index
    %c0_3 = arith.constant 0 : index
    %2 = vector.load %arg1[%c0_1, %c0_2, %c0_3] : memref<2x16x16xf32, #tpu.memory_space<vmem>>, vector<1x16x16xf32>
    %3 = vector.shape_cast %2 : vector<1x16x16xf32> to vector<16x16xf32>
    %c0_4 = arith.constant 0 : index
    %c0_5 = arith.constant 0 : index
    %4 = vector.load %arg6[%c0_4, %c0_5] : memref<32x32xf32, #tpu.memory_space<vmem>>, vector<16x16xf32>
    tpu.vector_store %arg6[%c0_4, %c0_5], %3 {strides = array<i32>} : memref<32x32xf32, #tpu.memory_space<vmem>>, vector<16x16xf32>,
    %c1 = arith.constant 1 : index
    %c0_6 = arith.constant 0 : index
    %c0_7 = arith.constant 0 : index
    %5 = vector.load %arg1[%c1, %c0_6, %c0_7] : memref<2x16x16xf32, #tpu.memory_space<vmem>>, vector<1x16x16xf32>
    %6 = vector.shape_cast %5 : vector<1x16x16xf32> to vector<16x16xf32>
    %c16 = arith.constant 16 : index
    %c16_8 = arith.constant 16 : index
    %7 = vector.load %arg6[%c16, %c16_8] : memref<32x32xf32, #tpu.memory_space<vmem>>, vector<16x16xf32>
    tpu.vector_store %arg6[%c16, %c16_8], %6 {strides = array<i32>} : memref<32x32xf32, #tpu.memory_space<vmem>>, vector<16x16xf32>,
    %c0_9 = arith.constant 0 : index
    %c0_10 = arith.constant 0 : index
    %c0_11 = arith.constant 0 : index
    %8 = vector.load %arg2[%c0_9, %c0_10, %c0_11] : memref<2x16x256xf32, #tpu.memory_space<vmem>>, vector<2x16x256xf32>
    %9 = vector.shape_cast %8 : vector<2x16x256xf32> to vector<32x256xf32>
    %c0_12 = arith.constant 0 : index
    %c0_13 = arith.constant 0 : index
    %10 = vector.load %arg6[%c0_12, %c0_13] : memref<32x32xf32, #tpu.memory_space<vmem>>, vector<32x32xf32>
    %cst_14 = arith.constant dense<0.000000e+00> : vector<32x256xf32>
    %11 = tpu.matmul %10, %9, %cst_14 {dimension_numbers = #tpu.dot_dimension_numbers<[1], [0], [0], [1], [0, 0, 1, 1], [], []>} : vector<32x32xf32>, vector<32x256xf32>, vector<32x256xf32> -> vector<32x256xf32>
    %c0_15 = arith.constant 0 : index
    %c0_16 = arith.constant 0 : index
    %12 = vector.load %arg3[%c0_15, %c0_16] : memref<32x64xf32, #tpu.memory_space<vmem>>, vector<32x64xf32>
    %c0_17 = arith.constant 0 : index
    %c0_18 = arith.constant 0 : index
    %13 = vector.load %arg4[%c0_17, %c0_18] : memref<1x64xf32, #tpu.memory_space<vmem>>, vector<1x64xf32>
    %14 = vector.extract_strided_slice %11 {offsets = [0, 0], sizes = [32, 32], strides = [1, 1]} : vector<32x256xf32> to vector<32x32xf32>
    %cst_19 = arith.constant dense<0.000000e+00> : vector<32x64xf32>
    %15 = tpu.matmul %14, %12, %cst_19 {dimension_numbers = #tpu.dot_dimension_numbers<[1], [0], [0], [1], [0, 0, 1, 1], [], []>} : vector<32x32xf32>, vector<32x64xf32>, vector<32x64xf32> -> vector<32x64xf32>
    %16 = vector.broadcast %13 : vector<1x64xf32> to vector<32x64xf32>
    %17 = arith.addf %15, %16 : vector<32x64xf32>
    %18 = vector.extract_strided_slice %17 {offsets = [0, 0], sizes = [32, 32], strides = [1, 1]} : vector<32x64xf32> to vector<32x32xf32>
    %19 = vector.extract_strided_slice %17 {offsets = [0, 32], sizes = [32, 32], strides = [1, 1]} : vector<32x64xf32> to vector<32x32xf32>
    %20 = arith.negf %19 : vector<32x32xf32>
    %21 = math.exp %20 : vector<32x32xf32>
    %cst_20 = arith.constant 1.000000e+00 : f32
    %22 = vector.broadcast %cst_20 : f32 to vector<32x32xf32>
    %23 = arith.addf %22, %21 : vector<32x32xf32>
    %24 = arith.divf %22, %23 : vector<32x32xf32>
    %25 = arith.mulf %18, %24 : vector<32x32xf32>
    %26 = vector.extract_strided_slice %11 {offsets = [0, 32], sizes = [32, 32], strides = [1, 1]} : vector<32x256xf32> to vector<32x32xf32>
    %cst_21 = arith.constant dense<0.000000e+00> : vector<32x64xf32>
    %27 = tpu.matmul %26, %12, %cst_21 {dimension_numbers = #tpu.dot_dimension_numbers<[1], [0], [0], [1], [0, 0, 1, 1], [], []>} : vector<32x32xf32>, vector<32x64xf32>, vector<32x64xf32> -> vector<32x64xf32>
    %28 = vector.broadcast %13 : vector<1x64xf32> to vector<32x64xf32>
    %29 = arith.addf %27, %28 : vector<32x64xf32>
    %30 = vector.extract_strided_slice %29 {offsets = [0, 0], sizes = [32, 32], strides = [1, 1]} : vector<32x64xf32> to vector<32x32xf32>
    %31 = vector.extract_strided_slice %29 {offsets = [0, 32], sizes = [32, 32], strides = [1, 1]} : vector<32x64xf32> to vector<32x32xf32>
    %32 = arith.negf %31 : vector<32x32xf32>
    %33 = math.exp %32 : vector<32x32xf32>
    %cst_22 = arith.constant 1.000000e+00 : f32
    %34 = vector.broadcast %cst_22 : f32 to vector<32x32xf32>
    %35 = arith.addf %34, %33 : vector<32x32xf32>
    %36 = arith.divf %34, %35 : vector<32x32xf32>
    %37 = arith.mulf %30, %36 : vector<32x32xf32>
    %38 = vector.extract_strided_slice %11 {offsets = [0, 64], sizes = [32, 32], strides = [1, 1]} : vector<32x256xf32> to vector<32x32xf32>
    %cst_23 = arith.constant dense<0.000000e+00> : vector<32x64xf32>
    %39 = tpu.matmul %38, %12, %cst_23 {dimension_numbers = #tpu.dot_dimension_numbers<[1], [0], [0], [1], [0, 0, 1, 1], [], []>} : vector<32x32xf32>, vector<32x64xf32>, vector<32x64xf32> -> vector<32x64xf32>
    %40 = vector.broadcast %13 : vector<1x64xf32> to vector<32x64xf32>
    %41 = arith.addf %39, %40 : vector<32x64xf32>
    %42 = vector.extract_strided_slice %41 {offsets = [0, 0], sizes = [32, 32], strides = [1, 1]} : vector<32x64xf32> to vector<32x32xf32>
    %43 = vector.extract_strided_slice %41 {offsets = [0, 32], sizes = [32, 32], strides = [1, 1]} : vector<32x64xf32> to vector<32x32xf32>
    %44 = arith.negf %43 : vector<32x32xf32>
    %45 = math.exp %44 : vector<32x32xf32>
    %cst_24 = arith.constant 1.000000e+00 : f32
    %46 = vector.broadcast %cst_24 : f32 to vector<32x32xf32>
    %47 = arith.addf %46, %45 : vector<32x32xf32>
    %48 = arith.divf %46, %47 : vector<32x32xf32>
    %49 = arith.mulf %42, %48 : vector<32x32xf32>
    %50 = vector.extract_strided_slice %11 {offsets = [0, 96], sizes = [32, 32], strides = [1, 1]} : vector<32x256xf32> to vector<32x32xf32>
    %cst_25 = arith.constant dense<0.000000e+00> : vector<32x64xf32>
    %51 = tpu.matmul %50, %12, %cst_25 {dimension_numbers = #tpu.dot_dimension_numbers<[1], [0], [0], [1], [0, 0, 1, 1], [], []>} : vector<32x32xf32>, vector<32x64xf32>, vector<32x64xf32> -> vector<32x64xf32>
    %52 = vector.broadcast %13 : vector<1x64xf32> to vector<32x64xf32>
    %53 = arith.addf %51, %52 : vector<32x64xf32>
    %54 = vector.extract_strided_slice %53 {offsets = [0, 0], sizes = [32, 32], strides = [1, 1]} : vector<32x64xf32> to vector<32x32xf32>
    %55 = vector.extract_strided_slice %53 {offsets = [0, 32], sizes = [32, 32], strides = [1, 1]} : vector<32x64xf32> to vector<32x32xf32>
    %56 = arith.negf %55 : vector<32x32xf32>
    %57 = math.exp %56 : vector<32x32xf32>
    %cst_26 = arith.constant 1.000000e+00 : f32
    %58 = vector.broadcast %cst_26 : f32 to vector<32x32xf32>
    %59 = arith.addf %58, %57 : vector<32x32xf32>
    %60 = arith.divf %58, %59 : vector<32x32xf32>
    %61 = arith.mulf %54, %60 : vector<32x32xf32>
    %62 = vector.extract_strided_slice %11 {offsets = [0, 128], sizes = [32, 32], strides = [1, 1]} : vector<32x256xf32> to vector<32x32xf32>
    %cst_27 = arith.constant dense<0.000000e+00> : vector<32x64xf32>
    %63 = tpu.matmul %62, %12, %cst_27 {dimension_numbers = #tpu.dot_dimension_numbers<[1], [0], [0], [1], [0, 0, 1, 1], [], []>} : vector<32x32xf32>, vector<32x64xf32>, vector<32x64xf32> -> vector<32x64xf32>
    %64 = vector.broadcast %13 : vector<1x64xf32> to vector<32x64xf32>
    %65 = arith.addf %63, %64 : vector<32x64xf32>
    %66 = vector.extract_strided_slice %65 {offsets = [0, 0], sizes = [32, 32], strides = [1, 1]} : vector<32x64xf32> to vector<32x32xf32>
    %67 = vector.extract_strided_slice %65 {offsets = [0, 32], sizes = [32, 32], strides = [1, 1]} : vector<32x64xf32> to vector<32x32xf32>
    %68 = arith.negf %67 : vector<32x32xf32>
    %69 = math.exp %68 : vector<32x32xf32>
    %cst_28 = arith.constant 1.000000e+00 : f32
    %70 = vector.broadcast %cst_28 : f32 to vector<32x32xf32>
    %71 = arith.addf %70, %69 : vector<32x32xf32>
    %72 = arith.divf %70, %71 : vector<32x32xf32>
    %73 = arith.mulf %66, %72 : vector<32x32xf32>
    %74 = vector.extract_strided_slice %11 {offsets = [0, 160], sizes = [32, 32], strides = [1, 1]} : vector<32x256xf32> to vector<32x32xf32>
    %cst_29 = arith.constant dense<0.000000e+00> : vector<32x64xf32>
    %75 = tpu.matmul %74, %12, %cst_29 {dimension_numbers = #tpu.dot_dimension_numbers<[1], [0], [0], [1], [0, 0, 1, 1], [], []>} : vector<32x32xf32>, vector<32x64xf32>, vector<32x64xf32> -> vector<32x64xf32>
    %76 = vector.broadcast %13 : vector<1x64xf32> to vector<32x64xf32>
    %77 = arith.addf %75, %76 : vector<32x64xf32>
    %78 = vector.extract_strided_slice %77 {offsets = [0, 0], sizes = [32, 32], strides = [1, 1]} : vector<32x64xf32> to vector<32x32xf32>
    %79 = vector.extract_strided_slice %77 {offsets = [0, 32], sizes = [32, 32], strides = [1, 1]} : vector<32x64xf32> to vector<32x32xf32>
    %80 = arith.negf %79 : vector<32x32xf32>
    %81 = math.exp %80 : vector<32x32xf32>
    %cst_30 = arith.constant 1.000000e+00 : f32
    %82 = vector.broadcast %cst_30 : f32 to vector<32x32xf32>
    %83 = arith.addf %82, %81 : vector<32x32xf32>
    %84 = arith.divf %82, %83 : vector<32x32xf32>
    %85 = arith.mulf %78, %84 : vector<32x32xf32>
    %86 = vector.extract_strided_slice %11 {offsets = [0, 192], sizes = [32, 32], strides = [1, 1]} : vector<32x256xf32> to vector<32x32xf32>
    %cst_31 = arith.constant dense<0.000000e+00> : vector<32x64xf32>
    %87 = tpu.matmul %86, %12, %cst_31 {dimension_numbers = #tpu.dot_dimension_numbers<[1], [0], [0], [1], [0, 0, 1, 1], [], []>} : vector<32x32xf32>, vector<32x64xf32>, vector<32x64xf32> -> vector<32x64xf32>
    %88 = vector.broadcast %13 : vector<1x64xf32> to vector<32x64xf32>
    %89 = arith.addf %87, %88 : vector<32x64xf32>
    %90 = vector.extract_strided_slice %89 {offsets = [0, 0], sizes = [32, 32], strides = [1, 1]} : vector<32x64xf32> to vector<32x32xf32>
    %91 = vector.extract_strided_slice %89 {offsets = [0, 32], sizes = [32, 32], strides = [1, 1]} : vector<32x64xf32> to vector<32x32xf32>
    %92 = arith.negf %91 : vector<32x32xf32>
    %93 = math.exp %92 : vector<32x32xf32>
    %cst_32 = arith.constant 1.000000e+00 : f32
    %94 = vector.broadcast %cst_32 : f32 to vector<32x32xf32>
    %95 = arith.addf %94, %93 : vector<32x32xf32>
    %96 = arith.divf %94, %95 : vector<32x32xf32>
    %97 = arith.mulf %90, %96 : vector<32x32xf32>
    %98 = vector.extract_strided_slice %11 {offsets = [0, 224], sizes = [32, 32], strides = [1, 1]} : vector<32x256xf32> to vector<32x32xf32>
    %cst_33 = arith.constant dense<0.000000e+00> : vector<32x64xf32>
    %99 = tpu.matmul %98, %12, %cst_33 {dimension_numbers = #tpu.dot_dimension_numbers<[1], [0], [0], [1], [0, 0, 1, 1], [], []>} : vector<32x32xf32>, vector<32x64xf32>, vector<32x64xf32> -> vector<32x64xf32>
    %100 = vector.broadcast %13 : vector<1x64xf32> to vector<32x64xf32>
    %101 = arith.addf %99, %100 : vector<32x64xf32>
    %102 = vector.extract_strided_slice %101 {offsets = [0, 0], sizes = [32, 32], strides = [1, 1]} : vector<32x64xf32> to vector<32x32xf32>
    %103 = vector.extract_strided_slice %101 {offsets = [0, 32], sizes = [32, 32], strides = [1, 1]} : vector<32x64xf32> to vector<32x32xf32>
    %104 = arith.negf %103 : vector<32x32xf32>
    %105 = math.exp %104 : vector<32x32xf32>
    %cst_34 = arith.constant 1.000000e+00 : f32
    %106 = vector.broadcast %cst_34 : f32 to vector<32x32xf32>
    %107 = arith.addf %106, %105 : vector<32x32xf32>
    %108 = arith.divf %106, %107 : vector<32x32xf32>
    %109 = arith.mulf %102, %108 : vector<32x32xf32>
    %110 = tpu.concatenate %25, %37, %49, %61, %73, %85, %97, %109 in 1 : vector<32x32xf32>, vector<32x32xf32>, vector<32x32xf32>, vector<32x32xf32>, vector<32x32xf32>, vector<32x32xf32>, vector<32x32xf32>, vector<32x32xf32> -> vector<32x256xf32>
    %111 = vector.shape_cast %110 : vector<32x256xf32> to vector<2x16x256xf32>
    %c0_35 = arith.constant 0 : index
    %c0_36 = arith.constant 0 : index
    %c0_37 = arith.constant 0 : index
    %112 = vector.load %arg5[%c0_35, %c0_36, %c0_37] : memref<2x16x256xf32, #tpu.memory_space<vmem>>, vector<2x16x256xf32>
    tpu.vector_store %arg5[%c0_35, %c0_36, %c0_37], %111 {strides = array<i32>} : memref<2x16x256xf32, #tpu.memory_space<vmem>>, vector<2x16x256xf32>,
    return
  }
  func.func @transform_0(%arg0: i32) -> (i32, i32, i32) {
    %c0_i32 = arith.constant 0 : i32
    %c0_i32_0 = arith.constant 0 : i32
    %c0_i32_1 = arith.constant 0 : i32
    return %arg0, %c0_i32, %c0_i32_0 : i32, i32, i32
  }
  func.func @transform_1(%arg0: i32) -> (i32, i32, i32) {
    %c0_i32 = arith.constant 0 : i32
    %c0_i32_0 = arith.constant 0 : i32
    %c0_i32_1 = arith.constant 0 : i32
    return %arg0, %c0_i32, %c0_i32_0 : i32, i32, i32
  }
  func.func @transform_2(%arg0: i32) -> (i32, i32) {
    %c0_i32 = arith.constant 0 : i32
    %c0_i32_0 = arith.constant 0 : i32
    %c0_i32_1 = arith.constant 0 : i32
    return %c0_i32, %c0_i32_0 : i32, i32
  }
  func.func @transform_3(%arg0: i32) -> (i32, i32) {
    %c0_i32 = arith.constant 0 : i32
    %c0_i32_0 = arith.constant 0 : i32
    %c0_i32_1 = arith.constant 0 : i32
    return %c0_i32, %c0_i32_0 : i32, i32
  }
  func.func @transform_4(%arg0: i32) -> (i32, i32, i32) {
    %c0_i32 = arith.constant 0 : i32
    %c0_i32_0 = arith.constant 0 : i32
    %c0_i32_1 = arith.constant 0 : i32
    return %arg0, %c0_i32, %c0_i32_0 : i32, i32, i32
  }
}

</mosaic_0001>

<llo_original>
// kernel: _dsgnn_apply.1
$region0: #{_dsgnn_apply.1}
  #allocation0 [shape = 'u32[]', space=smem, size = 0x4, offset = 0x4, fixed_abs, tag = 'smem constant byte address 0x4 - core index']
  #allocation1 [shape = 'u32[144,128]{1,0:T(1,128)}', space=vmem, size = 0x12000, scoped, tag = 'internal scratch']
  #allocation2 [shape = 'f32[32,32]{1,0:T(8,128)}', space=vmem, size = 0x4000, scoped, tag = 'scratch operand']
  %s0 = inlined_call_operand.vmem [shape: f32[2,16,16], index: 0, kind: input, shape index: {}]
  %s1 = inlined_call_operand.vmem [shape: f32[2,16,256], index: 1, kind: input, shape index: {}]
  %s2 = inlined_call_operand.vmem [shape: f32[32,64], index: 2, kind: input, shape index: {}]
  %s3 = inlined_call_operand.vmem [shape: f32[1,64], index: 3, kind: input, shape index: {}]
  %s4 = inlined_call_operand.vmem [shape: f32[2,16,256], index: 4, kind: output, shape index: {}]
  %s5 = sld [smem:[#allocation0]]
  $region26: #{_dsgnn_apply.1} parent=0
    _
  %s7 = ssub.s32 1, %s5
  %s8 = scalar_select 0, %s7, %s5
  // Predicated region
  $region2: #{_dsgnn_apply.1} parent=0 // pred_check
    _
  $region3: #{_dsgnn_apply.1} parent=0 // pred_check_branch
    %10 = sbr.rel (0) target = $region5
  $region4: #{_dsgnn_apply.1} parent=0 // pred_region
    _
  $region5: #{_dsgnn_apply.1} parent=0 // pred_fallthru
    _
  // Predicated region
  $region6: #{_dsgnn_apply.1} parent=0 // pred_check
    _
  $region7: #{_dsgnn_apply.1} parent=0 // pred_check_branch
    %12 = sbr.rel (0) target = $region9
  $region8: #{_dsgnn_apply.1} parent=0 // pred_region
    _
  $region9: #{_dsgnn_apply.1} parent=0 // pred_fallthru
    _
  // Predicated region
  $region10: #{_dsgnn_apply.1} parent=0 // pred_check
    _
  $region11: #{_dsgnn_apply.1} parent=0 // pred_check_branch
    %14 = sbr.rel (0) target = $region13
  $region12: #{_dsgnn_apply.1} parent=0 // pred_region
    _
  $region13: #{_dsgnn_apply.1} parent=0 // pred_fallthru
    _
  // Predicated region
  $region14: #{_dsgnn_apply.1} parent=0 // pred_check
    _
  $region15: #{_dsgnn_apply.1} parent=0 // pred_check_branch
    %16 = sbr.rel (0) target = $region17
  $region16: #{_dsgnn_apply.1} parent=0 // pred_region
    _
  $region17: #{_dsgnn_apply.1} parent=0 // pred_fallthru
    _
  %vm17 = vcmask 261120
  %18 = vst.msk [vmem:[#allocation2] sm:$0xff] %vm17, 0.0
  %19 = vst.msk [vmem:[#allocation2 + $0x8] sm:$0xff] %vm17, 0.0
  %20 = vst.msk [vmem:[#allocation2 + $0x10] sm:$0xff] %vm17, 0.0
  %21 = vst.msk [vmem:[#allocation2 + $0x18] sm:$0xff] %vm17, 0.0
  %v22 = vld [vmem:[%s0] sm:$0xff]
  %v23 = vld [vmem:[%s0 + $0x8] sm:$0xff]
  %vm24 = vcmask 130048
  %25 = vst.msk [vmem:[#allocation2] sm:$0xff] %vm24, %v22
  %26 = vst.msk [vmem:[#allocation2 + $0x8] sm:$0xff] %vm24, %v23
  %s27 = scalar_lea.vmem %s0, 16
  %v28 = vld [vmem:[%s27] sm:$0xff]
  %v29 = vld [vmem:[%s27 + $0x8] sm:$0xff]
  %32 = vrot.lane.b32.xlu0 %v28, 16
  %v33 = vpop.permute.xlu0 %32
  %34 = vrot.lane.b32.xlu0 %v29, 16
  %v35 = vpop.permute.xlu0 %34
  %vm38 = vcmask 261248
  %39 = vst.msk [vmem:[#allocation2 + $0x10] sm:$0xff] %vm38, %v33
  %40 = vst.msk [vmem:[#allocation2 + $0x18] sm:$0xff] %vm38, %v35
  %v41 = vld [vmem:[%s1] sm:$0xff]
  %v42 = vld [vmem:[%s1 + $0x8] sm:$0xff]
  %v43 = vld [vmem:[%s1 + $0x10] sm:$0xff]
  %v44 = vld [vmem:[%s1 + $0x18] sm:$0xff]
  %v45 = vld [vmem:[%s1 + $0x20] sm:$0xff]
  %v46 = vld [vmem:[%s1 + $0x28] sm:$0xff]
  %v47 = vld [vmem:[%s1 + $0x30] sm:$0xff]
  %v48 = vld [vmem:[%s1 + $0x38] sm:$0xff]
  %v49 = vld [vmem:[#allocation2] sm:$0xff]
  %v50 = vld [vmem:[#allocation2 + $0x8] sm:$0xff]
  %v51 = vld [vmem:[#allocation2 + $0x10] sm:$0xff]
  %v52 = vld [vmem:[#allocation2 + $0x18] sm:$0xff]
  %v54 = vsel %vm17, %v49, 0
  %v57 = vsel %vm17, %v50, 0
  %v60 = vsel %vm17, %v51, 0
  %v63 = vsel %vm17, %v52, 0
  %65 = vmatprep.subr.mxu0 %v42
  %66 = vmatpush1.msra.mxu0 %v41
  %67 = vmatprep.subr.mxu0 %v44
  %68 = vmatpush1.msra.mxu0 %v43
  %69 = vmatprep.subr.mxu0 %v46
  %70 = vmatpush1.msra.mxu0 %v45
  %71 = vmatprep.subr.mxu0 %v48
  %72 = vmatpush1.msra.mxu0 %v47
  %73 = vmatprep.subr.mxu0 0.0
  %74 = vmatpush1.msra.mxu0 0.0
  %75 = vmatprep.subr.mxu0 0.0
  %76 = vmatpush1.msra.mxu0 0.0
  %77 = vmatprep.subr.mxu0 0.0
  %78 = vmatpush1.msra.mxu0 0.0
  %79 = vmatprep.subr.mxu0 0.0
  %80 = vmatpush1.msra.mxu0 0.0
  %81 = vmatprep.subr.mxu0 0.0
  %82 = vmatpush1.msra.mxu0 0.0
  %83 = vmatprep.subr.mxu0 0.0
  %84 = vmatpush1.msra.mxu0 0.0
  %85 = vmatprep.subr.mxu0 0.0
  %86 = vmatpush1.msra.mxu0 0.0
  %87 = vmatprep.subr.mxu0 0.0
  %88 = vmatpush1.msra.mxu0 0.0
  %89 = vmatprep.subr.mxu0 0.0
  %90 = vmatpush1.msra.mxu0 0.0
  %91 = vmatprep.subr.mxu0 0.0
  %92 = vmatpush1.msra.mxu0 0.0
  %93 = vmatprep.subr.mxu0 0.0
  %94 = vmatpush1.msra.mxu0 0.0
  %95 = vmatprep.subr.mxu0 0.0
  %96 = vmatpush1.msra.mxu0 0.0
  %97 = vmatprep.subr.mxu0 0.0
  %98 = vmatpush1.msra.mxu0 0.0
  %99 = vmatprep.subr.mxu0 0.0
  %100 = vmatpush1.msra.mxu0 0.0
  %101 = vmatprep.subr.mxu0 0.0
  %102 = vmatpush1.msra.mxu0 0.0
  %103 = vmatprep.subr.mxu0 0.0
  %104 = vmatpush1.msra.mxu0 0.0
  %105 = vmatprep.subr.mxu0 0.0
  %106 = vmatpush1.msra.mxu0 0.0
  %107 = vmatprep.subr.mxu0 0.0
  %108 = vmatpush1.msra.mxu0 0.0
  %109 = vmatprep.subr.mxu0 0.0
  %110 = vmatpush1.msra.mxu0 0.0
  %111 = vmatprep.subr.mxu0 0.0
  %112 = vmatpush1.msra.mxu0 0.0
  %113 = vmatprep.subr.mxu0 0.0
  %114 = vmatpush1.msra.mxu0 0.0
  %115 = vmatprep.subr.mxu0 0.0
  %116 = vmatpush1.msra.mxu0 0.0
  %117 = vmatprep.subr.mxu0 0.0
  %118 = vmatpush1.msra.mxu0 0.0
  %119 = vmatprep.subr.mxu0 0.0
  %120 = vmatpush1.msra.mxu0 0.0
  %121 = vmatprep.subr.mxu0 0.0
  %122 = vmatpush1.msra.mxu0 0.0
  %123 = vmatprep.subr.mxu0 0.0
  %124 = vmatpush1.msra.mxu0 0.0
  %125 = vmatprep.subr.mxu0 0.0
  %126 = vmatpush1.msra.mxu0 0.0
  %127 = vmatprep.subr.mxu0 0.0
  %128 = vmatpush1.msra.mxu0 0.0
  %129 = vmatprep.mubr.f32.mxu0 0.0
  %130 = vmatmul.mubr.f32.gmra.mrb[0].mxu0 %v54
  %v131 = vpop.f32.mrb[0].mxu0
  %v132 = vadd.f32 0.0, %v131
  %v133 = vpop.f32.mrb[0].mxu0
  %v134 = vadd.f32 0.0, %v133
  %135 = vmatprep.mubr.f32.mxu0 0.0
  %136 = vmatmul.mubr.f32.gmra.mrb[0].mxu0 %v57
  %v137 = vpop.f32.mrb[0].mxu0
  %v138 = vadd.f32 0.0, %v137
  %v139 = vpop.f32.mrb[0].mxu0
  %v140 = vadd.f32 0.0, %v139
  %141 = vmatprep.mubr.f32.mxu0 0.0
  %142 = vmatmul.mubr.f32.gmra.mrb[0].mxu0 %v60
  %v143 = vpop.f32.mrb[0].mxu0
  %v144 = vadd.f32 0.0, %v143
  %v145 = vpop.f32.mrb[0].mxu0
  %v146 = vadd.f32 0.0, %v145
  %147 = vmatprep.mubr.f32.mxu0 0.0
  %148 = vmatmul.mubr.f32.gmra.mrb[0].mxu0 %v63
  %v149 = vpop.f32.mrb[0].mxu0
  %v150 = vadd.f32 0.0, %v149
  %v151 = vpop.f32.mrb[0].mxu0
  %v152 = vadd.f32 0.0, %v151
  %153 = vdwg.mxu0
  %v154 = vld [vmem:[%s2] sm:$0xff]
  %v155 = vld [vmem:[%s2 + $0x8] sm:$0xff]
  %v156 = vld [vmem:[%s2 + $0x10] sm:$0xff]
  %v157 = vld [vmem:[%s2 + $0x18] sm:$0xff]
  %v158 = vld [vmem:[%s3] sm:$0x1]
  %v160 = vlaneseq
  %v161 = vshrl.u32 %v160, 7
  %v162 = vsub.s32 0, %v161
  %v163 = vrot.slane %v158, %v162
  %v166 = vsel %vm17, %v132, 0
  %v169 = vsel %vm17, %v138, 0
  %v172 = vsel %vm17, %v144, 0
  %v175 = vsel %vm17, %v150, 0
  %177 = vmatprep.subr.mxu0 0.0
  %178 = vmatpush1.msra.mxu0 %v154
  %179 = vmatprep.subr.mxu0 0.0
  %180 = vmatpush1.msra.mxu0 %v155
  %181 = vmatprep.subr.mxu0 0.0
  %182 = vmatpush1.msra.mxu0 %v156
  %183 = vmatprep.subr.mxu0 0.0
  %184 = vmatpush1.msra.mxu0 %v157
  %185 = vmatprep.subr.mxu0 0.0
  %186 = vmatpush1.msra.mxu0 0.0
  %187 = vmatprep.subr.mxu0 0.0
  %188 = vmatpush1.msra.mxu0 0.0
  %189 = vmatprep.subr.mxu0 0.0
  %190 = vmatpush1.msra.mxu0 0.0
  %191 = vmatprep.subr.mxu0 0.0
  %192 = vmatpush1.msra.mxu0 0.0
  %193 = vmatprep.subr.mxu0 0.0
  %194 = vmatpush1.msra.mxu0 0.0
  %195 = vmatprep.subr.mxu0 0.0
  %196 = vmatpush1.msra.mxu0 0.0
  %197 = vmatprep.subr.mxu0 0.0
  %198 = vmatpush1.msra.mxu0 0.0
  %199 = vmatprep.subr.mxu0 0.0
  %200 = vmatpush1.msra.mxu0 0.0
  %201 = vmatprep.subr.mxu0 0.0
  %202 = vmatpush1.msra.mxu0 0.0
  %203 = vmatprep.subr.mxu0 0.0
  %204 = vmatpush1.msra.mxu0 0.0
  %205 = vmatprep.subr.mxu0 0.0
  %206 = vmatpush1.msra.mxu0 0.0
  %207 = vmatprep.subr.mxu0 0.0
  %208 = vmatpush1.msra.mxu0 0.0
  %209 = vmatprep.subr.mxu0 0.0
  %210 = vmatpush1.msra.mxu0 0.0
  %211 = vmatprep.subr.mxu0 0.0
  %212 = vmatpush1.msra.mxu0 0.0
  %213 = vmatprep.subr.mxu0 0.0
  %214 = vmatpush1.msra.mxu0 0.0
  %215 = vmatprep.subr.mxu0 0.0
  %216 = vmatpush1.msra.mxu0 0.0
  %217 = vmatprep.subr.mxu0 0.0
  %218 = vmatpush1.msra.mxu0 0.0
  %219 = vmatprep.subr.mxu0 0.0
  %220 = vmatpush1.msra.mxu0 0.0
  %221 = vmatprep.subr.mxu0 0.0
  %222 = vmatpush1.msra.mxu0 0.0
  %223 = vmatprep.subr.mxu0 0.0
  %224 = vmatpush1.msra.mxu0 0.0
  %225 = vmatprep.subr.mxu0 0.0
  %226 = vmatpush1.msra.mxu0 0.0
  %227 = vmatprep.subr.mxu0 0.0
  %228 = vmatpush1.msra.mxu0 0.0
  %229 = vmatprep.subr.mxu0 0.0
  %230 = vmatpush1.msra.mxu0 0.0
  %231 = vmatprep.subr.mxu0 0.0
  %232 = vmatpush1.msra.mxu0 0.0
  %233 = vmatprep.subr.mxu0 0.0
  %234 = vmatpush1.msra.mxu0 0.0
  %235 = vmatprep.subr.mxu0 0.0
  %236 = vmatpush1.msra.mxu0 0.0
  %237 = vmatprep.subr.mxu0 0.0
  %238 = vmatpush1.msra.mxu0 0.0
  %239 = vmatprep.subr.mxu0 0.0
  %240 = vmatpush1.msra.mxu0 0.0
  %241 = vmatprep.mubr.f32.mxu0 0.0
  %242 = vmatmul.mubr.f32.gmra.mrb[0].mxu0 %v166
  %v243 = vpop.f32.mrb[0].mxu0
  %v244 = vadd.f32 %v163, %v243
  %v245 = vpop.f32.mrb[0].mxu0
  %246 = vmatprep.mubr.f32.mxu0 0.0
  %247 = vmatmul.mubr.f32.gmra.mrb[0].mxu0 %v169
  %v248 = vpop.f32.mrb[0].mxu0
  %v249 = vadd.f32 %v163, %v248
  %v250 = vpop.f32.mrb[0].mxu0
  %251 = vmatprep.mubr.f32.mxu0 0.0
  %252 = vmatmul.mubr.f32.gmra.mrb[0].mxu0 %v172
  %v253 = vpop.f32.mrb[0].mxu0
  %v254 = vadd.f32 %v163, %v253
  %v255 = vpop.f32.mrb[0].mxu0
  %256 = vmatprep.mubr.f32.mxu0 0.0
  %257 = vmatmul.mubr.f32.gmra.mrb[0].mxu0 %v175
  %v258 = vpop.f32.mrb[0].mxu0
  %v259 = vadd.f32 %v163, %v258
  %v260 = vpop.f32.mrb[0].mxu0
  %261 = vdwg.mxu0
  %v262 = vxor.u32 %v244, 2147483648
  %v263 = vxor.u32 %v249, 2147483648
  %v264 = vxor.u32 %v254, 2147483648
  %v265 = vxor.u32 %v259, 2147483648
  %v266 = vmul.f32 %v262, 1.442695
  %v267 = vpow.pop %v266
  %v268 = vmul.f32 %v263, 1.442695
  %v269 = vpow.pop %v268
  %v270 = vmul.f32 %v264, 1.442695
  %v271 = vpow.pop %v270
  %v272 = vmul.f32 %v265, 1.442695
  %v273 = vpow.pop %v272
  %v274 = vadd.f32 %v267, 1.0
  %v275 = vadd.f32 %v269, 1.0
  %v276 = vadd.f32 %v271, 1.0
  %v277 = vadd.f32 %v273, 1.0
  %v278 = vrcp.pop %v274
  %v279 = vmul.f32 1.0, %v278
  %v280 = vrcp.pop %v275
  %v281 = vmul.f32 1.0, %v280
  %v282 = vrcp.pop %v276
  %v283 = vmul.f32 1.0, %v282
  %v284 = vrcp.pop %v277
  %v285 = vmul.f32 1.0, %v284
  %290 = vrot.lane.b32.xlu0 %v279, 96
  %v291 = vpop.permute.xlu0 %290
  %292 = vrot.lane.b32.xlu0 %v281, 96
  %v293 = vpop.permute.xlu0 %292
  %294 = vrot.lane.b32.xlu0 %v283, 96
  %v295 = vpop.permute.xlu0 %294
  %296 = vrot.lane.b32.xlu0 %v285, 96
  %v297 = vpop.permute.xlu0 %296
  %v302 = vmul.f32 %v244, %v291
  %v303 = vmul.f32 %v249, %v293
  %v304 = vmul.f32 %v254, %v295
  %v305 = vmul.f32 %v259, %v297
  %306 = vrot.lane.b32.xlu0 %v132, 96
  %v307 = vpop.permute.xlu0 %306
  %308 = vrot.lane.b32.xlu0 %v138, 96
  %v309 = vpop.permute.xlu0 %308
  %310 = vrot.lane.b32.xlu0 %v144, 96
  %v311 = vpop.permute.xlu0 %310
  %312 = vrot.lane.b32.xlu0 %v150, 96
  %v313 = vpop.permute.xlu0 %312
  %v314 = vsel %vm17, %v307, 0
  %v316 = vsel %vm17, %v309, 0
  %v318 = vsel %vm17, %v311, 0
  %v320 = vsel %vm17, %v313, 0
  %322 = vmatprep.subr.mxu0 0.0
  %323 = vmatpush1.msra.mxu0 %v154
  %324 = vmatprep.subr.mxu0 0.0
  %325 = vmatpush1.msra.mxu0 %v155
  %326 = vmatprep.subr.mxu0 0.0
  %327 = vmatpush1.msra.mxu0 %v156
  %328 = vmatprep.subr.mxu0 0.0
  %329 = vmatpush1.msra.mxu0 %v157
  %330 = vmatprep.subr.mxu0 0.0
  %331 = vmatpush1.msra.mxu0 0.0
  %332 = vmatprep.subr.mxu0 0.0
  %333 = vmatpush1.msra.mxu0 0.0
  %334 = vmatprep.subr.mxu0 0.0
  %335 = vmatpush1.msra.mxu0 0.0
  %336 = vmatprep.subr.mxu0 0.0
  %337 = vmatpush1.msra.mxu0 0.0
  %338 = vmatprep.subr.mxu0 0.0
  %339 = vmatpush1.msra.mxu0 0.0
  %340 = vmatprep.subr.mxu0 0.0
  %341 = vmatpush1.msra.mxu0 0.0
  %342 = vmatprep.subr.mxu0 0.0
  %343 = vmatpush1.msra.mxu0 0.0
  %344 = vmatprep.subr.mxu0 0.0
  %345 = vmatpush1.msra.mxu0 0.0
  %346 = vmatprep.subr.mxu0 0.0
  %347 = vmatpush1.msra.mxu0 0.0
  %348 = vmatprep.subr.mxu0 0.0
  %349 = vmatpush1.msra.mxu0 0.0
  %350 = vmatprep.subr.mxu0 0.0
  %351 = vmatpush1.msra.mxu0 0.0
  %352 = vmatprep.subr.mxu0 0.0
  %353 = vmatpush1.msra.mxu0 0.0
  %354 = vmatprep.subr.mxu0 0.0
  %355 = vmatpush1.msra.mxu0 0.0
  %356 = vmatprep.subr.mxu0 0.0
  %357 = vmatpush1.msra.mxu0 0.0
  %358 = vmatprep.subr.mxu0 0.0
  %359 = vmatpush1.msra.mxu0 0.0
  %360 = vmatprep.subr.mxu0 0.0
  %361 = vmatpush1.msra.mxu0 0.0
  %362 = vmatprep.subr.mxu0 0.0
  %363 = vmatpush1.msra.mxu0 0.0
  %364 = vmatprep.subr.mxu0 0.0
  %365 = vmatpush1.msra.mxu0 0.0
  %366 = vmatprep.subr.mxu0 0.0
  %367 = vmatpush1.msra.mxu0 0.0
  %368 = vmatprep.subr.mxu0 0.0
  %369 = vmatpush1.msra.mxu0 0.0
  %370 = vmatprep.subr.mxu0 0.0
  %371 = vmatpush1.msra.mxu0 0.0
  %372 = vmatprep.subr.mxu0 0.0
  %373 = vmatpush1.msra.mxu0 0.0
  %374 = vmatprep.subr.mxu0 0.0
  %375 = vmatpush1.msra.mxu0 0.0
  %376 = vmatprep.subr.mxu0 0.0
  %377 = vmatpush1.msra.mxu0 0.0
  %378 = vmatprep.subr.mxu0 0.0
  %379 = vmatpush1.msra.mxu0 0.0
  %380 = vmatprep.subr.mxu0 0.0
  %381 = vmatpush1.msra.mxu0 0.0
  %382 = vmatprep.subr.mxu0 0.0
  %383 = vmatpush1.msra.mxu0 0.0
  %384 = vmatprep.subr.mxu0 0.0
  %385 = vmatpush1.msra.mxu0 0.0
  %386 = vmatprep.mubr.f32.mxu0 0.0
  %387 = vmatmul.mubr.f32.gmra.mrb[0].mxu0 %v314
  %v388 = vpop.f32.mrb[0].mxu0
  %v389 = vadd.f32 %v163, %v388
  %v390 = vpop.f32.mrb[0].mxu0
  %391 = vmatprep.mubr.f32.mxu0 0.0
  %392 = vmatmul.mubr.f32.gmra.mrb[0].mxu0 %v316
  %v393 = vpop.f32.mrb[0].mxu0
  %v394 = vadd.f32 %v163, %v393
  %v395 = vpop.f32.mrb[0].mxu0
  %396 = vmatprep.mubr.f32.mxu0 0.0
  %397 = vmatmul.mubr.f32.gmra.mrb[0].mxu0 %v318
  %v398 = vpop.f32.mrb[0].mxu0
  %v399 = vadd.f32 %v163, %v398
  %v400 = vpop.f32.mrb[0].mxu0
  %401 = vmatprep.mubr.f32.mxu0 0.0
  %402 = vmatmul.mubr.f32.gmra.mrb[0].mxu0 %v320
  %v403 = vpop.f32.mrb[0].mxu0
  %v404 = vadd.f32 %v163, %v403
  %v405 = vpop.f32.mrb[0].mxu0
  %406 = vdwg.mxu0
  %v407 = vxor.u32 %v389, 2147483648
  %v408 = vxor.u32 %v394, 2147483648
  %v409 = vxor.u32 %v399, 2147483648
  %v410 = vxor.u32 %v404, 2147483648
  %v411 = vmul.f32 %v407, 1.442695
  %v412 = vpow.pop %v411
  %v413 = vmul.f32 %v408, 1.442695
  %v414 = vpow.pop %v413
  %v415 = vmul.f32 %v409, 1.442695
  %v416 = vpow.pop %v415
  %v417 = vmul.f32 %v410, 1.442695
  %v418 = vpow.pop %v417
  %v419 = vadd.f32 %v412, 1.0
  %v420 = vadd.f32 %v414, 1.0
  %v421 = vadd.f32 %v416, 1.0
  %v422 = vadd.f32 %v418, 1.0
  %v423 = vrcp.pop %v419
  %v424 = vmul.f32 1.0, %v423
  %v425 = vrcp.pop %v420
  %v426 = vmul.f32 1.0, %v425
  %v427 = vrcp.pop %v421
  %v428 = vmul.f32 1.0, %v427
  %v429 = vrcp.pop %v422
  %v430 = vmul.f32 1.0, %v429
  %435 = vrot.lane.b32.xlu0 %v424, 96
  %v436 = vpop.permute.xlu0 %435
  %437 = vrot.lane.b32.xlu0 %v426, 96
  %v438 = vpop.permute.xlu0 %437
  %439 = vrot.lane.b32.xlu0 %v428, 96
  %v440 = vpop.permute.xlu0 %439
  %441 = vrot.lane.b32.xlu0 %v430, 96
  %v442 = vpop.permute.xlu0 %441
  %v447 = vmul.f32 %v389, %v436
  %v448 = vmul.f32 %v394, %v438
  %v449 = vmul.f32 %v399, %v440
  %v450 = vmul.f32 %v404, %v442
  %451 = vrot.lane.b32.xlu0 %v132, 64
  %v452 = vpop.permute.xlu0 %451
  %453 = vrot.lane.b32.xlu0 %v138, 64
  %v454 = vpop.permute.xlu0 %453
  %455 = vrot.lane.b32.xlu0 %v144, 64
  %v456 = vpop.permute.xlu0 %455
  %457 = vrot.lane.b32.xlu0 %v150, 64
  %v458 = vpop.permute.xlu0 %457
  %v459 = vsel %vm17, %v452, 0
  %v461 = vsel %vm17, %v454, 0
  %v463 = vsel %vm17, %v456, 0
  %v465 = vsel %vm17, %v458, 0
  %467 = vmatprep.subr.mxu0 0.0
  %468 = vmatpush1.msra.mxu0 %v154
  %469 = vmatprep.subr.mxu0 0.0
  %470 = vmatpush1.msra.mxu0 %v155
  %471 = vmatprep.subr.mxu0 0.0
  %472 = vmatpush1.msra.mxu0 %v156
  %473 = vmatprep.subr.mxu0 0.0
  %474 = vmatpush1.msra.mxu0 %v157
  %475 = vmatprep.subr.mxu0 0.0
  %476 = vmatpush1.msra.mxu0 0.0
  %477 = vmatprep.subr.mxu0 0.0
  %478 = vmatpush1.msra.mxu0 0.0
  %479 = vmatprep.subr.mxu0 0.0
  %480 = vmatpush1.msra.mxu0 0.0
  %481 = vmatprep.subr.mxu0 0.0
  %482 = vmatpush1.msra.mxu0 0.0
  %483 = vmatprep.subr.mxu0 0.0
  %484 = vmatpush1.msra.mxu0 0.0
  %485 = vmatprep.subr.mxu0 0.0
  %486 = vmatpush1.msra.mxu0 0.0
  %487 = vmatprep.subr.mxu0 0.0
  %488 = vmatpush1.msra.mxu0 0.0
  %489 = vmatprep.subr.mxu0 0.0
  %490 = vmatpush1.msra.mxu0 0.0
  %491 = vmatprep.subr.mxu0 0.0
  %492 = vmatpush1.msra.mxu0 0.0
  %493 = vmatprep.subr.mxu0 0.0
  %494 = vmatpush1.msra.mxu0 0.0
  %495 = vmatprep.subr.mxu0 0.0
  %496 = vmatpush1.msra.mxu0 0.0
  %497 = vmatprep.subr.mxu0 0.0
  %498 = vmatpush1.msra.mxu0 0.0
  %499 = vmatprep.subr.mxu0 0.0
  %500 = vmatpush1.msra.mxu0 0.0
  %501 = vmatprep.subr.mxu0 0.0
  %502 = vmatpush1.msra.mxu0 0.0
  %503 = vmatprep.subr.mxu0 0.0
  %504 = vmatpush1.msra.mxu0 0.0
  %505 = vmatprep.subr.mxu0 0.0
  %506 = vmatpush1.msra.mxu0 0.0
  %507 = vmatprep.subr.mxu0 0.0
  %508 = vmatpush1.msra.mxu0 0.0
  %509 = vmatprep.subr.mxu0 0.0
  %510 = vmatpush1.msra.mxu0 0.0
  %511 = vmatprep.subr.mxu0 0.0
  %512 = vmatpush1.msra.mxu0 0.0
  %513 = vmatprep.subr.mxu0 0.0
  %514 = vmatpush1.msra.mxu0 0.0
  %515 = vmatprep.subr.mxu0 0.0
  %516 = vmatpush1.msra.mxu0 0.0
  %517 = vmatprep.subr.mxu0 0.0
  %518 = vmatpush1.msra.mxu0 0.0
  %519 = vmatprep.subr.mxu0 0.0
  %520 = vmatpush1.msra.mxu0 0.0
  %521 = vmatprep.subr.mxu0 0.0
  %522 = vmatpush1.msra.mxu0 0.0
  %523 = vmatprep.subr.mxu0 0.0
  %524 = vmatpush1.msra.mxu0 0.0
  %525 = vmatprep.subr.mxu0 0.0
  %526 = vmatpush1.msra.mxu0 0.0
  %527 = vmatprep.subr.mxu0 0.0
  %528 = vmatpush1.msra.mxu0 0.0
  %529 = vmatprep.subr.mxu0 0.0
  %530 = vmatpush1.msra.mxu0 0.0
  %531 = vmatprep.mubr.f32.mxu0 0.0
  %532 = vmatmul.mubr.f32.gmra.mrb[0].mxu0 %v459
  %v533 = vpop.f32.mrb[0].mxu0
  %v534 = vadd.f32 %v163, %v533
  %v535 = vpop.f32.mrb[0].mxu0
  %536 = vmatprep.mubr.f32.mxu0 0.0
  %537 = vmatmul.mubr.f32.gmra.mrb[0].mxu0 %v461
  %v538 = vpop.f32.mrb[0].mxu0
  %v539 = vadd.f32 %v163, %v538
  %v540 = vpop.f32.mrb[0].mxu0
  %541 = vmatprep.mubr.f32.mxu0 0.0
  %542 = vmatmul.mubr.f32.gmra.mrb[0].mxu0 %v463
  %v543 = vpop.f32.mrb[0].mxu0
  %v544 = vadd.f32 %v163, %v543
  %v545 = vpop.f32.mrb[0].mxu0
  %546 = vmatprep.mubr.f32.mxu0 0.0
  %547 = vmatmul.mubr.f32.gmra.mrb[0].mxu0 %v465
  %v548 = vpop.f32.mrb[0].mxu0
  %v549 = vadd.f32 %v163, %v548
  %v550 = vpop.f32.mrb[0].mxu0
  %551 = vdwg.mxu0
  %v552 = vxor.u32 %v534, 2147483648
  %v553 = vxor.u32 %v539, 2147483648
  %v554 = vxor.u32 %v544, 2147483648
  %v555 = vxor.u32 %v549, 2147483648
  %v556 = vmul.f32 %v552, 1.442695
  %v557 = vpow.pop %v556
  %v558 = vmul.f32 %v553, 1.442695
  %v559 = vpow.pop %v558
  %v560 = vmul.f32 %v554, 1.442695
  %v561 = vpow.pop %v560
  %v562 = vmul.f32 %v555, 1.442695
  %v563 = vpow.pop %v562
  %v564 = vadd.f32 %v557, 1.0
  %v565 = vadd.f32 %v559, 1.0
  %v566 = vadd.f32 %v561, 1.0
  %v567 = vadd.f32 %v563, 1.0
  %v568 = vrcp.pop %v564
  %v569 = vmul.f32 1.0, %v568
  %v570 = vrcp.pop %v565
  %v571 = vmul.f32 1.0, %v570
  %v572 = vrcp.pop %v566
  %v573 = vmul.f32 1.0, %v572
  %v574 = vrcp.pop %v567
  %v575 = vmul.f32 1.0, %v574
  %580 = vrot.lane.b32.xlu0 %v569, 96
  %v581 = vpop.permute.xlu0 %580
  %582 = vrot.lane.b32.xlu0 %v571, 96
  %v583 = vpop.permute.xlu0 %582
  %584 = vrot.lane.b32.xlu0 %v573, 96
  %v585 = vpop.permute.xlu0 %584
  %586 = vrot.lane.b32.xlu0 %v575, 96
  %v587 = vpop.permute.xlu0 %586
  %v592 = vmul.f32 %v534, %v581
  %v593 = vmul.f32 %v539, %v583
  %v594 = vmul.f32 %v544, %v585
  %v595 = vmul.f32 %v549, %v587
  %596 = vrot.lane.b32.xlu0 %v132, 32
  %v597 = vpop.permute.xlu0 %596
  %598 = vrot.lane.b32.xlu0 %v138, 32
  %v599 = vpop.permute.xlu0 %598
  %600 = vrot.lane.b32.xlu0 %v144, 32
  %v601 = vpop.permute.xlu0 %600
  %602 = vrot.lane.b32.xlu0 %v150, 32
  %v603 = vpop.permute.xlu0 %602
  %v604 = vsel %vm17, %v597, 0
  %v606 = vsel %vm17, %v599, 0
  %v608 = vsel %vm17, %v601, 0
  %v610 = vsel %vm17, %v603, 0
  %612 = vmatprep.subr.mxu0 0.0
  %613 = vmatpush1.msra.mxu0 %v154
  %614 = vmatprep.subr.mxu0 0.0
  %615 = vmatpush1.msra.mxu0 %v155
  %616 = vmatprep.subr.mxu0 0.0
  %617 = vmatpush1.msra.mxu0 %v156
  %618 = vmatprep.subr.mxu0 0.0
  %619 = vmatpush1.msra.mxu0 %v157
  %620 = vmatprep.subr.mxu0 0.0
  %621 = vmatpush1.msra.mxu0 0.0
  %622 = vmatprep.subr.mxu0 0.0
  %623 = vmatpush1.msra.mxu0 0.0
  %624 = vmatprep.subr.mxu0 0.0
  %625 = vmatpush1.msra.mxu0 0.0
  %626 = vmatprep.subr.mxu0 0.0
  %627 = vmatpush1.msra.mxu0 0.0
  %628 = vmatprep.subr.mxu0 0.0
  %629 = vmatpush1.msra.mxu0 0.0
  %630 = vmatprep.subr.mxu0 0.0
  %631 = vmatpush1.msra.mxu0 0.0
  %632 = vmatprep.subr.mxu0 0.0
  %633 = vmatpush1.msra.mxu0 0.0
  %634 = vmatprep.subr.mxu0 0.0
  %635 = vmatpush1.msra.mxu0 0.0
  %636 = vmatprep.subr.mxu0 0.0
  %637 = vmatpush1.msra.mxu0 0.0
  %638 = vmatprep.subr.mxu0 0.0
  %639 = vmatpush1.msra.mxu0 0.0
  %640 = vmatprep.subr.mxu0 0.0
  %641 = vmatpush1.msra.mxu0 0.0
  %642 = vmatprep.subr.mxu0 0.0
  %643 = vmatpush1.msra.mxu0 0.0
  %644 = vmatprep.subr.mxu0 0.0
  %645 = vmatpush1.msra.mxu0 0.0
  %646 = vmatprep.subr.mxu0 0.0
  %647 = vmatpush1.msra.mxu0 0.0
  %648 = vmatprep.subr.mxu0 0.0
  %649 = vmatpush1.msra.mxu0 0.0
  %650 = vmatprep.subr.mxu0 0.0
  %651 = vmatpush1.msra.mxu0 0.0
  %652 = vmatprep.subr.mxu0 0.0
  %653 = vmatpush1.msra.mxu0 0.0
  %654 = vmatprep.subr.mxu0 0.0
  %655 = vmatpush1.msra.mxu0 0.0
  %656 = vmatprep.subr.mxu0 0.0
  %657 = vmatpush1.msra.mxu0 0.0
  %658 = vmatprep.subr.mxu0 0.0
  %659 = vmatpush1.msra.mxu0 0.0
  %660 = vmatprep.subr.mxu0 0.0
  %661 = vmatpush1.msra.mxu0 0.0
  %662 = vmatprep.subr.mxu0 0.0
  %663 = vmatpush1.msra.mxu0 0.0
  %664 = vmatprep.subr.mxu0 0.0
  %665 = vmatpush1.msra.mxu0 0.0
  %666 = vmatprep.subr.mxu0 0.0
  %667 = vmatpush1.msra.mxu0 0.0
  %668 = vmatprep.subr.mxu0 0.0
  %669 = vmatpush1.msra.mxu0 0.0
  %670 = vmatprep.subr.mxu0 0.0
  %671 = vmatpush1.msra.mxu0 0.0
  %672 = vmatprep.subr.mxu0 0.0
  %673 = vmatpush1.msra.mxu0 0.0
  %674 = vmatprep.subr.mxu0 0.0
  %675 = vmatpush1.msra.mxu0 0.0
  %676 = vmatprep.mubr.f32.mxu0 0.0
  %677 = vmatmul.mubr.f32.gmra.mrb[0].mxu0 %v604
  %v678 = vpop.f32.mrb[0].mxu0
  %v679 = vadd.f32 %v163, %v678
  %v680 = vpop.f32.mrb[0].mxu0
  %681 = vmatprep.mubr.f32.mxu0 0.0
  %682 = vmatmul.mubr.f32.gmra.mrb[0].mxu0 %v606
  %v683 = vpop.f32.mrb[0].mxu0
  %v684 = vadd.f32 %v163, %v683
  %v685 = vpop.f32.mrb[0].mxu0
  %686 = vmatprep.mubr.f32.mxu0 0.0
  %687 = vmatmul.mubr.f32.gmra.mrb[0].mxu0 %v608
  %v688 = vpop.f32.mrb[0].mxu0
  %v689 = vadd.f32 %v163, %v688
  %v690 = vpop.f32.mrb[0].mxu0
  %691 = vmatprep.mubr.f32.mxu0 0.0
  %692 = vmatmul.mubr.f32.gmra.mrb[0].mxu0 %v610
  %v693 = vpop.f32.mrb[0].mxu0
  %v694 = vadd.f32 %v163, %v693
  %v695 = vpop.f32.mrb[0].mxu0
  %696 = vdwg.mxu0
  %v697 = vxor.u32 %v679, 2147483648
  %v698 = vxor.u32 %v684, 2147483648
  %v699 = vxor.u32 %v689, 2147483648
  %v700 = vxor.u32 %v694, 2147483648
  %v701 = vmul.f32 %v697, 1.442695
  %v702 = vpow.pop %v701
  %v703 = vmul.f32 %v698, 1.442695
  %v704 = vpow.pop %v703
  %v705 = vmul.f32 %v699, 1.442695
  %v706 = vpow.pop %v705
  %v707 = vmul.f32 %v700, 1.442695
  %v708 = vpow.pop %v707
  %v709 = vadd.f32 %v702, 1.0
  %v710 = vadd.f32 %v704, 1.0
  %v711 = vadd.f32 %v706, 1.0
  %v712 = vadd.f32 %v708, 1.0
  %v713 = vrcp.pop %v709
  %v714 = vmul.f32 1.0, %v713
  %v715 = vrcp.pop %v710
  %v716 = vmul.f32 1.0, %v715
  %v717 = vrcp.pop %v711
  %v718 = vmul.f32 1.0, %v717
  %v719 = vrcp.pop %v712
  %v720 = vmul.f32 1.0, %v719
  %725 = vrot.lane.b32.xlu0 %v714, 96
  %v726 = vpop.permute.xlu0 %725
  %727 = vrot.lane.b32.xlu0 %v716, 96
  %v728 = vpop.permute.xlu0 %727
  %729 = vrot.lane.b32.xlu0 %v718, 96
  %v730 = vpop.permute.xlu0 %729
  %731 = vrot.lane.b32.xlu0 %v720, 96
  %v732 = vpop.permute.xlu0 %731
  %v737 = vmul.f32 %v679, %v726
  %v738 = vmul.f32 %v684, %v728
  %v739 = vmul.f32 %v689, %v730
  %v740 = vmul.f32 %v694, %v732
  %v742 = vsel %vm17, %v134, 0
  %v745 = vsel %vm17, %v140, 0
  %v748 = vsel %vm17, %v146, 0
  %v751 = vsel %vm17, %v152, 0
  %753 = vmatprep.subr.mxu0 0.0
  %754 = vmatpush1.msra.mxu0 %v154
  %755 = vmatprep.subr.mxu0 0.0
  %756 = vmatpush1.msra.mxu0 %v155
  %757 = vmatprep.subr.mxu0 0.0
  %758 = vmatpush1.msra.mxu0 %v156
  %759 = vmatprep.subr.mxu0 0.0
  %760 = vmatpush1.msra.mxu0 %v157
  %761 = vmatprep.subr.mxu0 0.0
  %762 = vmatpush1.msra.mxu0 0.0
  %763 = vmatprep.subr.mxu0 0.0
  %764 = vmatpush1.msra.mxu0 0.0
  %765 = vmatprep.subr.mxu0 0.0
  %766 = vmatpush1.msra.mxu0 0.0
  %767 = vmatprep.subr.mxu0 0.0
  %768 = vmatpush1.msra.mxu0 0.0
  %769 = vmatprep.subr.mxu0 0.0
  %770 = vmatpush1.msra.mxu0 0.0
  %771 = vmatprep.subr.mxu0 0.0
  %772 = vmatpush1.msra.mxu0 0.0
  %773 = vmatprep.subr.mxu0 0.0
  %774 = vmatpush1.msra.mxu0 0.0
  %775 = vmatprep.subr.mxu0 0.0
  %776 = vmatpush1.msra.mxu0 0.0
  %777 = vmatprep.subr.mxu0 0.0
  %778 = vmatpush1.msra.mxu0 0.0
  %779 = vmatprep.subr.mxu0 0.0
  %780 = vmatpush1.msra.mxu0 0.0
  %781 = vmatprep.subr.mxu0 0.0
  %782 = vmatpush1.msra.mxu0 0.0
  %783 = vmatprep.subr.mxu0 0.0
  %784 = vmatpush1.msra.mxu0 0.0
  %785 = vmatprep.subr.mxu0 0.0
  %786 = vmatpush1.msra.mxu0 0.0
  %787 = vmatprep.subr.mxu0 0.0
  %788 = vmatpush1.msra.mxu0 0.0
  %789 = vmatprep.subr.mxu0 0.0
  %790 = vmatpush1.msra.mxu0 0.0
  %791 = vmatprep.subr.mxu0 0.0
  %792 = vmatpush1.msra.mxu0 0.0
  %793 = vmatprep.subr.mxu0 0.0
  %794 = vmatpush1.msra.mxu0 0.0
  %795 = vmatprep.subr.mxu0 0.0
  %796 = vmatpush1.msra.mxu0 0.0
  %797 = vmatprep.subr.mxu0 0.0
  %798 = vmatpush1.msra.mxu0 0.0
  %799 = vmatprep.subr.mxu0 0.0
  %800 = vmatpush1.msra.mxu0 0.0
  %801 = vmatprep.subr.mxu0 0.0
  %802 = vmatpush1.msra.mxu0 0.0
  %803 = vmatprep.subr.mxu0 0.0
  %804 = vmatpush1.msra.mxu0 0.0
  %805 = vmatprep.subr.mxu0 0.0
  %806 = vmatpush1.msra.mxu0 0.0
  %807 = vmatprep.subr.mxu0 0.0
  %808 = vmatpush1.msra.mxu0 0.0
  %809 = vmatprep.subr.mxu0 0.0
  %810 = vmatpush1.msra.mxu0 0.0
  %811 = vmatprep.subr.mxu0 0.0
  %812 = vmatpush1.msra.mxu0 0.0
  %813 = vmatprep.subr.mxu0 0.0
  %814 = vmatpush1.msra.mxu0 0.0
  %815 = vmatprep.subr.mxu0 0.0
  %816 = vmatpush1.msra.mxu0 0.0
  %817 = vmatprep.mubr.f32.mxu0 0.0
  %818 = vmatmul.mubr.f32.gmra.mrb[0].mxu0 %v742
  %v819 = vpop.f32.mrb[0].mxu0
  %v820 = vadd.f32 %v163, %v819
  %v821 = vpop.f32.mrb[0].mxu0
  %822 = vmatprep.mubr.f32.mxu0 0.0
  %823 = vmatmul.mubr.f32.gmra.mrb[0].mxu0 %v745
  %v824 = vpop.f32.mrb[0].mxu0
  %v825 = vadd.f32 %v163, %v824
  %v826 = vpop.f32.mrb[0].mxu0
  %827 = vmatprep.mubr.f32.mxu0 0.0
  %828 = vmatmul.mubr.f32.gmra.mrb[0].mxu0 %v748
  %v829 = vpop.f32.mrb[0].mxu0
  %v830 = vadd.f32 %v163, %v829
  %v831 = vpop.f32.mrb[0].mxu0
  %832 = vmatprep.mubr.f32.mxu0 0.0
  %833 = vmatmul.mubr.f32.gmra.mrb[0].mxu0 %v751
  %v834 = vpop.f32.mrb[0].mxu0
  %v835 = vadd.f32 %v163, %v834
  %v836 = vpop.f32.mrb[0].mxu0
  %837 = vdwg.mxu0
  %v838 = vxor.u32 %v820, 2147483648
  %v839 = vxor.u32 %v825, 2147483648
  %v840 = vxor.u32 %v830, 2147483648
  %v841 = vxor.u32 %v835, 2147483648
  %v842 = vmul.f32 %v838, 1.442695
  %v843 = vpow.pop %v842
  %v844 = vmul.f32 %v839, 1.442695
  %v845 = vpow.pop %v844
  %v846 = vmul.f32 %v840, 1.442695
  %v847 = vpow.pop %v846
  %v848 = vmul.f32 %v841, 1.442695
  %v849 = vpow.pop %v848
  %v850 = vadd.f32 %v843, 1.0
  %v851 = vadd.f32 %v845, 1.0
  %v852 = vadd.f32 %v847, 1.0
  %v853 = vadd.f32 %v849, 1.0
  %v854 = vrcp.pop %v850
  %v855 = vmul.f32 1.0, %v854
  %v856 = vrcp.pop %v851
  %v857 = vmul.f32 1.0, %v856
  %v858 = vrcp.pop %v852
  %v859 = vmul.f32 1.0, %v858
  %v860 = vrcp.pop %v853
  %v861 = vmul.f32 1.0, %v860
  %866 = vrot.lane.b32.xlu0 %v855, 96
  %v867 = vpop.permute.xlu0 %866
  %868 = vrot.lane.b32.xlu0 %v857, 96
  %v869 = vpop.permute.xlu0 %868
  %870 = vrot.lane.b32.xlu0 %v859, 96
  %v871 = vpop.permute.xlu0 %870
  %872 = vrot.lane.b32.xlu0 %v861, 96
  %v873 = vpop.permute.xlu0 %872
  %v878 = vmul.f32 %v820, %v867
  %v879 = vmul.f32 %v825, %v869
  %v880 = vmul.f32 %v830, %v871
  %v881 = vmul.f32 %v835, %v873
  %882 = vrot.lane.b32.xlu0 %v134, 96
  %v883 = vpop.permute.xlu0 %882
  %884 = vrot.lane.b32.xlu0 %v140, 96
  %v885 = vpop.permute.xlu0 %884
  %886 = vrot.lane.b32.xlu0 %v146, 96
  %v887 = vpop.permute.xlu0 %886
  %888 = vrot.lane.b32.xlu0 %v152, 96
  %v889 = vpop.permute.xlu0 %888
  %v890 = vsel %vm17, %v883, 0
  %v892 = vsel %vm17, %v885, 0
  %v894 = vsel %vm17, %v887, 0
  %v896 = vsel %vm17, %v889, 0
  %898 = vmatprep.subr.mxu0 0.0
  %899 = vmatpush1.msra.mxu0 %v154
  %900 = vmatprep.subr.mxu0 0.0
  %901 = vmatpush1.msra.mxu0 %v155
  %902 = vmatprep.subr.mxu0 0.0
  %903 = vmatpush1.msra.mxu0 %v156
  %904 = vmatprep.subr.mxu0 0.0
  %905 = vmatpush1.msra.mxu0 %v157
  %906 = vmatprep.subr.mxu0 0.0
  %907 = vmatpush1.msra.mxu0 0.0
  %908 = vmatprep.subr.mxu0 0.0
  %909 = vmatpush1.msra.mxu0 0.0
  %910 = vmatprep.subr.mxu0 0.0
  %911 = vmatpush1.msra.mxu0 0.0
  %912 = vmatprep.subr.mxu0 0.0
  %913 = vmatpush1.msra.mxu0 0.0
  %914 = vmatprep.subr.mxu0 0.0
  %915 = vmatpush1.msra.mxu0 0.0
  %916 = vmatprep.subr.mxu0 0.0
  %917 = vmatpush1.msra.mxu0 0.0
  %918 = vmatprep.subr.mxu0 0.0
  %919 = vmatpush1.msra.mxu0 0.0
  %920 = vmatprep.subr.mxu0 0.0
  %921 = vmatpush1.msra.mxu0 0.0
  %922 = vmatprep.subr.mxu0 0.0
  %923 = vmatpush1.msra.mxu0 0.0
  %924 = vmatprep.subr.mxu0 0.0
  %925 = vmatpush1.msra.mxu0 0.0
  %926 = vmatprep.subr.mxu0 0.0
  %927 = vmatpush1.msra.mxu0 0.0
  %928 = vmatprep.subr.mxu0 0.0
  %929 = vmatpush1.msra.mxu0 0.0
  %930 = vmatprep.subr.mxu0 0.0
  %931 = vmatpush1.msra.mxu0 0.0
  %932 = vmatprep.subr.mxu0 0.0
  %933 = vmatpush1.msra.mxu0 0.0
  %934 = vmatprep.subr.mxu0 0.0
  %935 = vmatpush1.msra.mxu0 0.0
  %936 = vmatprep.subr.mxu0 0.0
  %937 = vmatpush1.msra.mxu0 0.0
  %938 = vmatprep.subr.mxu0 0.0
  %939 = vmatpush1.msra.mxu0 0.0
  %940 = vmatprep.subr.mxu0 0.0
  %941 = vmatpush1.msra.mxu0 0.0
  %942 = vmatprep.subr.mxu0 0.0
  %943 = vmatpush1.msra.mxu0 0.0
  %944 = vmatprep.subr.mxu0 0.0
  %945 = vmatpush1.msra.mxu0 0.0
  %946 = vmatprep.subr.mxu0 0.0
  %947 = vmatpush1.msra.mxu0 0.0
  %948 = vmatprep.subr.mxu0 0.0
  %949 = vmatpush1.msra.mxu0 0.0
  %950 = vmatprep.subr.mxu0 0.0
  %951 = vmatpush1.msra.mxu0 0.0
  %952 = vmatprep.subr.mxu0 0.0
  %953 = vmatpush1.msra.mxu0 0.0
  %954 = vmatprep.subr.mxu0 0.0
  %955 = vmatpush1.msra.mxu0 0.0
  %956 = vmatprep.subr.mxu0 0.0
  %957 = vmatpush1.msra.mxu0 0.0
  %958 = vmatprep.subr.mxu0 0.0
  %959 = vmatpush1.msra.mxu0 0.0
  %960 = vmatprep.subr.mxu0 0.0
  %961 = vmatpush1.msra.mxu0 0.0
  %962 = vmatprep.mubr.f32.mxu0 0.0
  %963 = vmatmul.mubr.f32.gmra.mrb[0].mxu0 %v890
  %v964 = vpop.f32.mrb[0].mxu0
  %v965 = vadd.f32 %v163, %v964
  %v966 = vpop.f32.mrb[0].mxu0
  %967 = vmatprep.mubr.f32.mxu0 0.0
  %968 = vmatmul.mubr.f32.gmra.mrb[0].mxu0 %v892
  %v969 = vpop.f32.mrb[0].mxu0
  %v970 = vadd.f32 %v163, %v969
  %v971 = vpop.f32.mrb[0].mxu0
  %972 = vmatprep.mubr.f32.mxu0 0.0
  %973 = vmatmul.mubr.f32.gmra.mrb[0].mxu0 %v894
  %v974 = vpop.f32.mrb[0].mxu0
  %v975 = vadd.f32 %v163, %v974
  %v976 = vpop.f32.mrb[0].mxu0
  %977 = vmatprep.mubr.f32.mxu0 0.0
  %978 = vmatmul.mubr.f32.gmra.mrb[0].mxu0 %v896
  %v979 = vpop.f32.mrb[0].mxu0
  %v980 = vadd.f32 %v163, %v979
  %v981 = vpop.f32.mrb[0].mxu0
  %982 = vdwg.mxu0
  %v983 = vxor.u32 %v965, 2147483648
  %v984 = vxor.u32 %v970, 2147483648
  %v985 = vxor.u32 %v975, 2147483648
  %v986 = vxor.u32 %v980, 2147483648
  %v987 = vmul.f32 %v983, 1.442695
  %v988 = vpow.pop %v987
  %v989 = vmul.f32 %v984, 1.442695
  %v990 = vpow.pop %v989
  %v991 = vmul.f32 %v985, 1.442695
  %v992 = vpow.pop %v991
  %v993 = vmul.f32 %v986, 1.442695
  %v994 = vpow.pop %v993
  %v995 = vadd.f32 %v988, 1.0
  %v996 = vadd.f32 %v990, 1.0
  %v997 = vadd.f32 %v992, 1.0
  %v998 = vadd.f32 %v994, 1.0
  %v999 = vrcp.pop %v995
  %v1000 = vmul.f32 1.0, %v999
  %v1001 = vrcp.pop %v996
  %v1002 = vmul.f32 1.0, %v1001
  %v1003 = vrcp.pop %v997
  %v1004 = vmul.f32 1.0, %v1003
  %v1005 = vrcp.pop %v998
  %v1006 = vmul.f32 1.0, %v1005
  %1011 = vrot.lane.b32.xlu0 %v1000, 96
  %v1012 = vpop.permute.xlu0 %1011
  %1013 = vrot.lane.b32.xlu0 %v1002, 96
  %v1014 = vpop.permute.xlu0 %1013
  %1015 = vrot.lane.b32.xlu0 %v1004, 96
  %v1016 = vpop.permute.xlu0 %1015
  %1017 = vrot.lane.b32.xlu0 %v1006, 96
  %v1018 = vpop.permute.xlu0 %1017
  %v1023 = vmul.f32 %v965, %v1012
  %v1024 = vmul.f32 %v970, %v1014
  %v1025 = vmul.f32 %v975, %v1016
  %v1026 = vmul.f32 %v980, %v1018
  %1027 = vrot.lane.b32.xlu0 %v134, 64
  %v1028 = vpop.permute.xlu0 %1027
  %1029 = vrot.lane.b32.xlu0 %v140, 64
  %v1030 = vpop.permute.xlu0 %1029
  %1031 = vrot.lane.b32.xlu0 %v146, 64
  %v1032 = vpop.permute.xlu0 %1031
  %1033 = vrot.lane.b32.xlu0 %v152, 64
  %v1034 = vpop.permute.xlu0 %1033
  %v1035 = vsel %vm17, %v1028, 0
  %v1037 = vsel %vm17, %v1030, 0
  %v1039 = vsel %vm17, %v1032, 0
  %v1041 = vsel %vm17, %v1034, 0
  %1043 = vmatprep.subr.mxu0 0.0
  %1044 = vmatpush1.msra.mxu0 %v154
  %1045 = vmatprep.subr.mxu0 0.0
  %1046 = vmatpush1.msra.mxu0 %v155
  %1047 = vmatprep.subr.mxu0 0.0
  %1048 = vmatpush1.msra.mxu0 %v156
  %1049 = vmatprep.subr.mxu0 0.0
  %1050 = vmatpush1.msra.mxu0 %v157
  %1051 = vmatprep.subr.mxu0 0.0
  %1052 = vmatpush1.msra.mxu0 0.0
  %1053 = vmatprep.subr.mxu0 0.0
  %1054 = vmatpush1.msra.mxu0 0.0
  %1055 = vmatprep.subr.mxu0 0.0
  %1056 = vmatpush1.msra.mxu0 0.0
  %1057 = vmatprep.subr.mxu0 0.0
  %1058 = vmatpush1.msra.mxu0 0.0
  %1059 = vmatprep.subr.mxu0 0.0
  %1060 = vmatpush1.msra.mxu0 0.0
  %1061 = vmatprep.subr.mxu0 0.0
  %1062 = vmatpush1.msra.mxu0 0.0
  %1063 = vmatprep.subr.mxu0 0.0
  %1064 = vmatpush1.msra.mxu0 0.0
  %1065 = vmatprep.subr.mxu0 0.0
  %1066 = vmatpush1.msra.mxu0 0.0
  %1067 = vmatprep.subr.mxu0 0.0
  %1068 = vmatpush1.msra.mxu0 0.0
  %1069 = vmatprep.subr.mxu0 0.0
  %1070 = vmatpush1.msra.mxu0 0.0
  %1071 = vmatprep.subr.mxu0 0.0
  %1072 = vmatpush1.msra.mxu0 0.0
  %1073 = vmatprep.subr.mxu0 0.0
  %1074 = vmatpush1.msra.mxu0 0.0
  %1075 = vmatprep.subr.mxu0 0.0
  %1076 = vmatpush1.msra.mxu0 0.0
  %1077 = vmatprep.subr.mxu0 0.0
  %1078 = vmatpush1.msra.mxu0 0.0
  %1079 = vmatprep.subr.mxu0 0.0
  %1080 = vmatpush1.msra.mxu0 0.0
  %1081 = vmatprep.subr.mxu0 0.0
  %1082 = vmatpush1.msra.mxu0 0.0
  %1083 = vmatprep.subr.mxu0 0.0
  %1084 = vmatpush1.msra.mxu0 0.0
  %1085 = vmatprep.subr.mxu0 0.0
  %1086 = vmatpush1.msra.mxu0 0.0
  %1087 = vmatprep.subr.mxu0 0.0
  %1088 = vmatpush1.msra.mxu0 0.0
  %1089 = vmatprep.subr.mxu0 0.0
  %1090 = vmatpush1.msra.mxu0 0.0
  %1091 = vmatprep.subr.mxu0 0.0
  %1092 = vmatpush1.msra.mxu0 0.0
  %1093 = vmatprep.subr.mxu0 0.0
  %1094 = vmatpush1.msra.mxu0 0.0
  %1095 = vmatprep.subr.mxu0 0.0
  %1096 = vmatpush1.msra.mxu0 0.0
  %1097 = vmatprep.subr.mxu0 0.0
  %1098 = vmatpush1.msra.mxu0 0.0
  %1099 = vmatprep.subr.mxu0 0.0
  %1100 = vmatpush1.msra.mxu0 0.0
  %1101 = vmatprep.subr.mxu0 0.0
  %1102 = vmatpush1.msra.mxu0 0.0
  %1103 = vmatprep.subr.mxu0 0.0
  %1104 = vmatpush1.msra.mxu0 0.0
  %1105 = vmatprep.subr.mxu0 0.0
  %1106 = vmatpush1.msra.mxu0 0.0
  %1107 = vmatprep.mubr.f32.mxu0 0.0
  %1108 = vmatmul.mubr.f32.gmra.mrb[0].mxu0 %v1035
  %v1109 = vpop.f32.mrb[0].mxu0
  %v1110 = vadd.f32 %v163, %v1109
  %v1111 = vpop.f32.mrb[0].mxu0
  %1112 = vmatprep.mubr.f32.mxu0 0.0
  %1113 = vmatmul.mubr.f32.gmra.mrb[0].mxu0 %v1037
  %v1114 = vpop.f32.mrb[0].mxu0
  %v1115 = vadd.f32 %v163, %v1114
  %v1116 = vpop.f32.mrb[0].mxu0
  %1117 = vmatprep.mubr.f32.mxu0 0.0
  %1118 = vmatmul.mubr.f32.gmra.mrb[0].mxu0 %v1039
  %v1119 = vpop.f32.mrb[0].mxu0
  %v1120 = vadd.f32 %v163, %v1119
  %v1121 = vpop.f32.mrb[0].mxu0
  %1122 = vmatprep.mubr.f32.mxu0 0.0
  %1123 = vmatmul.mubr.f32.gmra.mrb[0].mxu0 %v1041
  %v1124 = vpop.f32.mrb[0].mxu0
  %v1125 = vadd.f32 %v163, %v1124
  %v1126 = vpop.f32.mrb[0].mxu0
  %1127 = vdwg.mxu0
  %v1128 = vxor.u32 %v1110, 2147483648
  %v1129 = vxor.u32 %v1115, 2147483648
  %v1130 = vxor.u32 %v1120, 2147483648
  %v1131 = vxor.u32 %v1125, 2147483648
  %v1132 = vmul.f32 %v1128, 1.442695
  %v1133 = vpow.pop %v1132
  %v1134 = vmul.f32 %v1129, 1.442695
  %v1135 = vpow.pop %v1134
  %v1136 = vmul.f32 %v1130, 1.442695
  %v1137 = vpow.pop %v1136
  %v1138 = vmul.f32 %v1131, 1.442695
  %v1139 = vpow.pop %v1138
  %v1140 = vadd.f32 %v1133, 1.0
  %v1141 = vadd.f32 %v1135, 1.0
  %v1142 = vadd.f32 %v1137, 1.0
  %v1143 = vadd.f32 %v1139, 1.0
  %v1144 = vrcp.pop %v1140
  %v1145 = vmul.f32 1.0, %v1144
  %v1146 = vrcp.pop %v1141
  %v1147 = vmul.f32 1.0, %v1146
  %v1148 = vrcp.pop %v1142
  %v1149 = vmul.f32 1.0, %v1148
  %v1150 = vrcp.pop %v1143
  %v1151 = vmul.f32 1.0, %v1150
  %1156 = vrot.lane.b32.xlu0 %v1145, 96
  %v1157 = vpop.permute.xlu0 %1156
  %1158 = vrot.lane.b32.xlu0 %v1147, 96
  %v1159 = vpop.permute.xlu0 %1158
  %1160 = vrot.lane.b32.xlu0 %v1149, 96
  %v1161 = vpop.permute.xlu0 %1160
  %1162 = vrot.lane.b32.xlu0 %v1151, 96
  %v1163 = vpop.permute.xlu0 %1162
  %v1168 = vmul.f32 %v1110, %v1157
  %v1169 = vmul.f32 %v1115, %v1159
  %v1170 = vmul.f32 %v1120, %v1161
  %v1171 = vmul.f32 %v1125, %v1163
  %1172 = vrot.lane.b32.xlu0 %v134, 32
  %v1173 = vpop.permute.xlu0 %1172
  %1174 = vrot.lane.b32.xlu0 %v140, 32
  %v1175 = vpop.permute.xlu0 %1174
  %1176 = vrot.lane.b32.xlu0 %v146, 32
  %v1177 = vpop.permute.xlu0 %1176
  %1178 = vrot.lane.b32.xlu0 %v152, 32
  %v1179 = vpop.permute.xlu0 %1178
  %v1180 = vsel %vm17, %v1173, 0
  %v1182 = vsel %vm17, %v1175, 0
  %v1184 = vsel %vm17, %v1177, 0
  %v1186 = vsel %vm17, %v1179, 0
  %1188 = vmatprep.subr.mxu0 0.0
  %1189 = vmatpush1.msra.mxu0 %v154
  %1190 = vmatprep.subr.mxu0 0.0
  %1191 = vmatpush1.msra.mxu0 %v155
  %1192 = vmatprep.subr.mxu0 0.0
  %1193 = vmatpush1.msra.mxu0 %v156
  %1194 = vmatprep.subr.mxu0 0.0
  %1195 = vmatpush1.msra.mxu0 %v157
  %1196 = vmatprep.subr.mxu0 0.0
  %1197 = vmatpush1.msra.mxu0 0.0
  %1198 = vmatprep.subr.mxu0 0.0
  %1199 = vmatpush1.msra.mxu0 0.0
  %1200 = vmatprep.subr.mxu0 0.0
  %1201 = vmatpush1.msra.mxu0 0.0
  %1202 = vmatprep.subr.mxu0 0.0
  %1203 = vmatpush1.msra.mxu0 0.0
  %1204 = vmatprep.subr.mxu0 0.0
  %1205 = vmatpush1.msra.mxu0 0.0
  %1206 = vmatprep.subr.mxu0 0.0
  %1207 = vmatpush1.msra.mxu0 0.0
  %1208 = vmatprep.subr.mxu0 0.0
  %1209 = vmatpush1.msra.mxu0 0.0
  %1210 = vmatprep.subr.mxu0 0.0
  %1211 = vmatpush1.msra.mxu0 0.0
  %1212 = vmatprep.subr.mxu0 0.0
  %1213 = vmatpush1.msra.mxu0 0.0
  %1214 = vmatprep.subr.mxu0 0.0
  %1215 = vmatpush1.msra.mxu0 0.0
  %1216 = vmatprep.subr.mxu0 0.0
  %1217 = vmatpush1.msra.mxu0 0.0
  %1218 = vmatprep.subr.mxu0 0.0
  %1219 = vmatpush1.msra.mxu0 0.0
  %1220 = vmatprep.subr.mxu0 0.0
  %1221 = vmatpush1.msra.mxu0 0.0
  %1222 = vmatprep.subr.mxu0 0.0
  %1223 = vmatpush1.msra.mxu0 0.0
  %1224 = vmatprep.subr.mxu0 0.0
  %1225 = vmatpush1.msra.mxu0 0.0
  %1226 = vmatprep.subr.mxu0 0.0
  %1227 = vmatpush1.msra.mxu0 0.0
  %1228 = vmatprep.subr.mxu0 0.0
  %1229 = vmatpush1.msra.mxu0 0.0
  %1230 = vmatprep.subr.mxu0 0.0
  %1231 = vmatpush1.msra.mxu0 0.0
  %1232 = vmatprep.subr.mxu0 0.0
  %1233 = vmatpush1.msra.mxu0 0.0
  %1234 = vmatprep.subr.mxu0 0.0
  %1235 = vmatpush1.msra.mxu0 0.0
  %1236 = vmatprep.subr.mxu0 0.0
  %1237 = vmatpush1.msra.mxu0 0.0
  %1238 = vmatprep.subr.mxu0 0.0
  %1239 = vmatpush1.msra.mxu0 0.0
  %1240 = vmatprep.subr.mxu0 0.0
  %1241 = vmatpush1.msra.mxu0 0.0
  %1242 = vmatprep.subr.mxu0 0.0
  %1243 = vmatpush1.msra.mxu0 0.0
  %1244 = vmatprep.subr.mxu0 0.0
  %1245 = vmatpush1.msra.mxu0 0.0
  %1246 = vmatprep.subr.mxu0 0.0
  %1247 = vmatpush1.msra.mxu0 0.0
  %1248 = vmatprep.subr.mxu0 0.0
  %1249 = vmatpush1.msra.mxu0 0.0
  %1250 = vmatprep.subr.mxu0 0.0
  %1251 = vmatpush1.msra.mxu0 0.0
  %1252 = vmatprep.mubr.f32.mxu0 0.0
  %1253 = vmatmul.mubr.f32.gmra.mrb[0].mxu0 %v1180
  %v1254 = vpop.f32.mrb[0].mxu0
  %v1255 = vadd.f32 %v163, %v1254
  %v1256 = vpop.f32.mrb[0].mxu0
  %1257 = vmatprep.mubr.f32.mxu0 0.0
  %1258 = vmatmul.mubr.f32.gmra.mrb[0].mxu0 %v1182
  %v1259 = vpop.f32.mrb[0].mxu0
  %v1260 = vadd.f32 %v163, %v1259
  %v1261 = vpop.f32.mrb[0].mxu0
  %1262 = vmatprep.mubr.f32.mxu0 0.0
  %1263 = vmatmul.mubr.f32.gmra.mrb[0].mxu0 %v1184
  %v1264 = vpop.f32.mrb[0].mxu0
  %v1265 = vadd.f32 %v163, %v1264
  %v1266 = vpop.f32.mrb[0].mxu0
  %1267 = vmatprep.mubr.f32.mxu0 0.0
  %1268 = vmatmul.mubr.f32.gmra.mrb[0].mxu0 %v1186
  %v1269 = vpop.f32.mrb[0].mxu0
  %v1270 = vadd.f32 %v163, %v1269
  %v1271 = vpop.f32.mrb[0].mxu0
  %1272 = vdwg.mxu0
  %v1273 = vxor.u32 %v1255, 2147483648
  %v1274 = vxor.u32 %v1260, 2147483648
  %v1275 = vxor.u32 %v1265, 2147483648
  %v1276 = vxor.u32 %v1270, 2147483648
  %v1277 = vmul.f32 %v1273, 1.442695
  %v1278 = vpow.pop %v1277
  %v1279 = vmul.f32 %v1274, 1.442695
  %v1280 = vpow.pop %v1279
  %v1281 = vmul.f32 %v1275, 1.442695
  %v1282 = vpow.pop %v1281
  %v1283 = vmul.f32 %v1276, 1.442695
  %v1284 = vpow.pop %v1283
  %v1285 = vadd.f32 %v1278, 1.0
  %v1286 = vadd.f32 %v1280, 1.0
  %v1287 = vadd.f32 %v1282, 1.0
  %v1288 = vadd.f32 %v1284, 1.0
  %v1289 = vrcp.pop %v1285
  %v1290 = vmul.f32 1.0, %v1289
  %v1291 = vrcp.pop %v1286
  %v1292 = vmul.f32 1.0, %v1291
  %v1293 = vrcp.pop %v1287
  %v1294 = vmul.f32 1.0, %v1293
  %v1295 = vrcp.pop %v1288
  %v1296 = vmul.f32 1.0, %v1295
  %1301 = vrot.lane.b32.xlu0 %v1290, 96
  %v1302 = vpop.permute.xlu0 %1301
  %1303 = vrot.lane.b32.xlu0 %v1292, 96
  %v1304 = vpop.permute.xlu0 %1303
  %1305 = vrot.lane.b32.xlu0 %v1294, 96
  %v1306 = vpop.permute.xlu0 %1305
  %1307 = vrot.lane.b32.xlu0 %v1296, 96
  %v1308 = vpop.permute.xlu0 %1307
  %v1313 = vmul.f32 %v1255, %v1302
  %v1314 = vmul.f32 %v1260, %v1304
  %v1315 = vmul.f32 %v1265, %v1306
  %v1316 = vmul.f32 %v1270, %v1308
  %1321 = vrot.lane.b32.xlu0 %v447, 32
  %v1322 = vpop.permute.xlu0 %1321
  %1323 = vrot.lane.b32.xlu0 %v448, 32
  %v1324 = vpop.permute.xlu0 %1323
  %1325 = vrot.lane.b32.xlu0 %v449, 32
  %v1326 = vpop.permute.xlu0 %1325
  %1327 = vrot.lane.b32.xlu0 %v450, 32
  %v1328 = vpop.permute.xlu0 %1327
  %1337 = vrot.lane.b32.xlu0 %v592, 64
  %v1338 = vpop.permute.xlu0 %1337
  %1339 = vrot.lane.b32.xlu0 %v593, 64
  %v1340 = vpop.permute.xlu0 %1339
  %1341 = vrot.lane.b32.xlu0 %v594, 64
  %v1342 = vpop.permute.xlu0 %1341
  %1343 = vrot.lane.b32.xlu0 %v595, 64
  %v1344 = vpop.permute.xlu0 %1343
  %1353 = vrot.lane.b32.xlu0 %v737, 96
  %v1354 = vpop.permute.xlu0 %1353
  %1355 = vrot.lane.b32.xlu0 %v738, 96
  %v1356 = vpop.permute.xlu0 %1355
  %1357 = vrot.lane.b32.xlu0 %v739, 96
  %v1358 = vpop.permute.xlu0 %1357
  %1359 = vrot.lane.b32.xlu0 %v740, 96
  %v1360 = vpop.permute.xlu0 %1359
  %1369 = vrot.lane.b32.xlu0 %v1023, 32
  %v1370 = vpop.permute.xlu0 %1369
  %1371 = vrot.lane.b32.xlu0 %v1024, 32
  %v1372 = vpop.permute.xlu0 %1371
  %1373 = vrot.lane.b32.xlu0 %v1025, 32
  %v1374 = vpop.permute.xlu0 %1373
  %1375 = vrot.lane.b32.xlu0 %v1026, 32
  %v1376 = vpop.permute.xlu0 %1375
  %1385 = vrot.lane.b32.xlu0 %v1168, 64
  %v1386 = vpop.permute.xlu0 %1385
  %1387 = vrot.lane.b32.xlu0 %v1169, 64
  %v1388 = vpop.permute.xlu0 %1387
  %1389 = vrot.lane.b32.xlu0 %v1170, 64
  %v1390 = vpop.permute.xlu0 %1389
  %1391 = vrot.lane.b32.xlu0 %v1171, 64
  %v1392 = vpop.permute.xlu0 %1391
  %1401 = vrot.lane.b32.xlu0 %v1313, 96
  %v1402 = vpop.permute.xlu0 %1401
  %1403 = vrot.lane.b32.xlu0 %v1314, 96
  %v1404 = vpop.permute.xlu0 %1403
  %1405 = vrot.lane.b32.xlu0 %v1315, 96
  %v1406 = vpop.permute.xlu0 %1405
  %1407 = vrot.lane.b32.xlu0 %v1316, 96
  %v1408 = vpop.permute.xlu0 %1407
  %v1413 = vsel %vm17, %v302, %v1322
  %v1414 = vsel %vm17, %v303, %v1324
  %v1415 = vsel %vm17, %v304, %v1326
  %v1416 = vsel %vm17, %v305, %v1328
  %vm1417 = vcmask 523264
  %v1418 = vsel %vm1417, %v1413, %v1338
  %v1419 = vsel %vm1417, %v1414, %v1340
  %v1420 = vsel %vm1417, %v1415, %v1342
  %v1421 = vsel %vm1417, %v1416, %v1344
  %vm1422 = vcmask 785408
  %v1423 = vsel %vm1422, %v1418, %v1354
  %v1424 = vsel %vm1422, %v1419, %v1356
  %v1425 = vsel %vm1422, %v1420, %v1358
  %v1426 = vsel %vm1422, %v1421, %v1360
  %v1427 = vsel %vm17, %v878, %v1370
  %v1428 = vsel %vm17, %v879, %v1372
  %v1429 = vsel %vm17, %v880, %v1374
  %v1430 = vsel %vm17, %v881, %v1376
  %v1431 = vsel %vm1417, %v1427, %v1386
  %v1432 = vsel %vm1417, %v1428, %v1388
  %v1433 = vsel %vm1417, %v1429, %v1390
  %v1434 = vsel %vm1417, %v1430, %v1392
  %v1435 = vsel %vm1422, %v1431, %v1402
  %v1436 = vsel %vm1422, %v1432, %v1404
  %v1437 = vsel %vm1422, %v1433, %v1406
  %v1438 = vsel %vm1422, %v1434, %v1408
  %1439 = vst [vmem:[%s4] sm:$0xff] %v1423
  %1440 = vst [vmem:[%s4 + $0x8] sm:$0xff] %v1435
  %1441 = vst [vmem:[%s4 + $0x10] sm:$0xff] %v1424
  %1442 = vst [vmem:[%s4 + $0x18] sm:$0xff] %v1436
  %1443 = vst [vmem:[%s4 + $0x20] sm:$0xff] %v1425
  %1444 = vst [vmem:[%s4 + $0x28] sm:$0xff] %v1437
  %1445 = vst [vmem:[%s4 + $0x30] sm:$0xff] %v1426
  %1446 = vst [vmem:[%s4 + $0x38] sm:$0xff] %v1438
  // Predicated region
  $region18: #{_dsgnn_apply.1} parent=0 // pred_check
    _
  $region19: #{_dsgnn_apply.1} parent=0 // pred_check_branch
    %1448 = sbr.rel (0) target = $region21
  $region20: #{_dsgnn_apply.1} parent=0 // pred_region
    _
  $region21: #{_dsgnn_apply.1} parent=0 // pred_fallthru
    _
  // Predicated region
  $region22: #{_dsgnn_apply.1} parent=0 // pred_check
    _
  $region23: #{_dsgnn_apply.1} parent=0 // pred_check_branch
    %1450 = sbr.rel (0) target = $region25
  $region24: #{_dsgnn_apply.1} parent=0 // pred_region
    _
  $region25: #{_dsgnn_apply.1} parent=0 // pred_fallthru
    _

</llo_original>
